<compile_context>
chip_gen: v7x
topology: tpu7x:2x2x1
jax: 0.10.0
libtpu: 0.0.40
codegen_flags: <defaults>
</compile_context>

<pallas_src>
import functools

import jax
import jax.numpy as jnp
from jax.experimental import pallas as pl
from jax.experimental.pallas import tpu as pltpu

EPS = 1e-5


# ----------------------------------------------------------------------------
# Kernel 1: fused [optional per-channel affine+ReLU on the input] -> 3x3 "same"
# conv (im2col on the MXU) -> per-image BN statistics, optionally writing the
# output already zero-padded for the next conv.
# ----------------------------------------------------------------------------
def _conv3x3_bn_stats_kernel(x_ref, w_ref, scale_ref, shift_ref,
                             o_ref, stats_ref, *,
                             H, W, Cin, Cout,
                             apply_input_bn_relu, pad_output, use_full_im2col):
    x = x_ref[0]                                         # (H+2, W+2, Cin) f32

    if apply_input_bn_relu:
        # Fused BatchNorm(affine) + ReLU of the *previous* layer, applied on the
        # fly to the conv input tile.  The input tile carries a zero halo; after
        # the affine the halo would become relu(shift) != 0, so re-zero it.
        z = jnp.maximum(x * scale_ref[...] + shift_ref[...], 0.0)
        r = jax.lax.broadcasted_iota(jnp.int32, (H + 2, W + 2, 1), 0)
        c = jax.lax.broadcasted_iota(jnp.int32, (H + 2, W + 2, 1), 1)
        interior = (r >= 1) & (r <= H) & (c >= 1) & (c <= W)
        x = jnp.where(interior, z, 0.0)

    if use_full_im2col:
        # Small Cin (layer 1): fold all 9 taps into one contraction, K = 9*Cin.
        taps = [x[dy:dy + H, dx:dx + W, :] for dy in range(3) for dx in range(3)]
        patches = jnp.concatenate(taps, axis=-1).reshape(H * W, 9 * Cin)
        w_full = w_ref[...].reshape(9 * Cin, Cout)
        acc = jnp.dot(patches, w_full, preferred_element_type=jnp.float32)
    else:
        # Larger Cin: one matmul per dy, K = 3*Cin.  The (H*W, Cout) accumulator
        # is kept small enough (<= ~16 vregs at these tiles) to stay in registers.
        acc = jnp.zeros((H * W, Cout), dtype=jnp.float32)
        for dy in range(3):
            rows = x[dy:dy + H]                          # (H, W+2, Cin)
            band = jnp.concatenate([rows[:, dx:dx + W, :] for dx in range(3)],
                                   axis=-1).reshape(H * W, 3 * Cin)
            acc = acc + jnp.dot(band, w_ref[dy],
                                preferred_element_type=jnp.float32)

    # NOTE: no conv bias add -- it is cancelled exactly by the batch-stat BN.

    # Per-image channel statistics for the following batch-stat BatchNorm.
    s = jnp.sum(acc, axis=0, keepdims=True)              # (1, Cout)
    ss = jnp.sum(acc * acc, axis=0, keepdims=True)       # (1, Cout)
    stats_ref[0] = jnp.concatenate([s, ss], axis=0)      # (2, Cout)

    y = acc.reshape(H, W, Cout)
    if pad_output:
        # Emit the activation already zero-padded so the next conv needs no
        # separate jnp.pad pass over the 64-channel activation in HBM.
        zc = jnp.zeros((H, 1, Cout), jnp.float32)
        zr = jnp.zeros((1, W + 2, Cout), jnp.float32)
        y = jnp.concatenate([zr, jnp.concatenate([zc, y, zc], axis=1), zr], axis=0)
    o_ref[0] = y


def conv3x3_bn_stats(x_pad, w_hwio, scale, shift, *,
                     apply_input_bn_relu, pad_output):
    """x_pad: (N, H+2, W+2, Cin) spatially zero-padded input (NHWC, f32)."""
    N, Hp2, Wp2, Cin = x_pad.shape
    H, W = Hp2 - 2, Wp2 - 2
    Cout = w_hwio.shape[-1]
    use_full = (9 * Cin) <= 128

    w3 = w_hwio.reshape(3, 3 * Cin, Cout).astype(jnp.float32)
    scale2 = scale.reshape(1, Cin).astype(jnp.float32)
    shift2 = shift.reshape(1, Cin).astype(jnp.float32)

    out_h = H + 2 if pad_output else H
    out_w = W + 2 if pad_output else W

    kernel = functools.partial(
        _conv3x3_bn_stats_kernel, H=H, W=W, Cin=Cin, Cout=Cout,
        apply_input_bn_relu=apply_input_bn_relu, pad_output=pad_output,
        use_full_im2col=use_full)

    y, stats = pl.pallas_call(
        kernel,
        out_shape=(jax.ShapeDtypeStruct((N, out_h, out_w, Cout), jnp.float32),
                   jax.ShapeDtypeStruct((N, 2, Cout), jnp.float32)),
        grid=(N,),
        in_specs=[
            pl.BlockSpec((1, Hp2, Wp2, Cin), lambda n: (n, 0, 0, 0)),
            pl.BlockSpec((3, 3 * Cin, Cout), lambda n: (0, 0, 0)),
            pl.BlockSpec((1, Cin), lambda n: (0, 0)),
            pl.BlockSpec((1, Cin), lambda n: (0, 0)),
        ],
        out_specs=(pl.BlockSpec((1, out_h, out_w, Cout), lambda n: (n, 0, 0, 0)),
                   pl.BlockSpec((1, 2, Cout), lambda n: (n, 0, 0))),
        compiler_params=pltpu.CompilerParams(
            dimension_semantics=("parallel",)),
    )(x_pad, w3, scale2, shift2)
    return y, stats


# ----------------------------------------------------------------------------
# Kernel 2: fused BatchNorm(affine) + ReLU + MaxPool2d(2,2).
# Pooling via reshape+max (VPU only); output stored lane-dense (last dim W/2*C).
# ----------------------------------------------------------------------------
def _bn_relu_pool_kernel(x_ref, scale_ref, shift_ref, o_ref, *, H, W, C):
    H2, W2 = H // 2, W // 2
    z = jnp.maximum(x_ref[0] * scale_ref[...] + shift_ref[...], 0.0)   # (H, W, C)
    zh = z.reshape(H2, 2, W * C)
    r = jnp.maximum(zh[:, 0, :], zh[:, 1, :])                          # (H2, W*C)
    r2 = r.reshape(H2, W2, 2 * C)
    p = jnp.maximum(r2[:, :, :C], r2[:, :, C:])                        # (H2, W2, C)
    o_ref[0] = p.reshape(H2, W2 * C)                                   # lane-dense store


def bn_relu_maxpool2(x_nhwc, scale, shift):
    N, H, W, C = x_nhwc.shape
    H2, W2 = H // 2, W // 2
    kernel = functools.partial(_bn_relu_pool_kernel, H=H, W=W, C=C)
    out = pl.pallas_call(
        kernel,
        out_shape=jax.ShapeDtypeStruct((N, H2, W2 * C), jnp.float32),
        grid=(N,),
        in_specs=[pl.BlockSpec((1, H, W, C), lambda n: (n, 0, 0, 0)),
                  pl.BlockSpec((1, C), lambda n: (0, 0)),
                  pl.BlockSpec((1, C), lambda n: (0, 0))],
        out_specs=pl.BlockSpec((1, H2, W2 * C), lambda n: (n, 0, 0)),
        compiler_params=pltpu.CompilerParams(
            dimension_semantics=("parallel",)),
    )(x_nhwc, scale.reshape(1, C).astype(jnp.float32),
      shift.reshape(1, C).astype(jnp.float32))
    return out.reshape(N, H2, W2, C)


# ----------------------------------------------------------------------------
# MyModel forward (L = 7 layers of VGG19_bn features)
# ----------------------------------------------------------------------------
def _bn_affine(gamma, beta, stats, count):
    """Turn accumulated (N,2,C) sums into per-channel scale/shift for y*scale+shift."""
    total = stats[:, 0, :].sum(axis=0)
    total_sq = stats[:, 1, :].sum(axis=0)
    mean = total / count
    var = jnp.maximum(total_sq / count - mean * mean, 0.0)   # biased variance
    scale = gamma * jax.lax.rsqrt(var + EPS)
    shift = beta - mean * scale
    return scale, shift


def my_model_forward(image_nchw, params):
    x = jnp.transpose(image_nchw, (0, 2, 3, 1)).astype(jnp.float32)   # NCHW -> NHWC
    N, H, W, Cin = x.shape
    count = N * H * W

    # Only the tiny 3-channel input image is padded by XLA; the 64-channel
    # inter-layer activation is emitted already padded by the conv1 kernel.
    x_pad = jnp.pad(x, ((0, 0), (1, 1), (1, 1), (0, 0)))

    # Conv1 (bias b1 dropped: exactly cancelled by batch-stat BN1 mean subtraction).
    y1p, s1 = conv3x3_bn_stats(
        x_pad, params["w1"],
        jnp.ones((Cin,), jnp.float32), jnp.zeros((Cin,), jnp.float32),
        apply_input_bn_relu=False, pad_output=True)
    scale1, shift1 = _bn_affine(params["g1"], params["be1"], s1, count)

    # Conv2 with BN1 + ReLU fused into its input path (bias b2 likewise dropped).
    y2, s2 = conv3x3_bn_stats(
        y1p, params["w2"], scale1, shift1,
        apply_input_bn_relu=True, pad_output=False)
    scale2, shift2 = _bn_affine(params["g2"], params["be2"], s2, count)

    # BN2 + ReLU + MaxPool2d(2,2) fused.
    out = bn_relu_maxpool2(y2, scale2, shift2)
    return jnp.transpose(out, (0, 3, 1, 2))                            # NHWC -> NCHW


# ----------------------------------------------------------------------------
# Pure-JAX reference for validation (keeps the conv biases; BN cancels them).
# ----------------------------------------------------------------------------
def _ref_forward(image_nchw, params):
    x = jnp.transpose(image_nchw, (0, 2, 3, 1))

    def conv(x, w, b):
        y = jax.lax.conv_general_dilated(
            x, w, window_strides=(1, 1), padding="SAME",
            dimension_numbers=("NHWC", "HWIO", "NHWC"))
        return y + b.reshape(1, 1, 1, -1)

    def bnr(x, g, be):
        m = jnp.mean(x, axis=(0, 1, 2), keepdims=True)
        v = jnp.mean((x - m) ** 2, axis=(0, 1, 2), keepdims=True)
        y = (x - m) * jax.lax.rsqrt(v + EPS) * g.reshape(1, 1, 1, -1) \
            + be.reshape(1, 1, 1, -1)
        return jnp.maximum(y, 0.0)

    x = bnr(conv(x, params["w1"], params["b1"]), params["g1"], params["be1"])
    x = bnr(conv(x, params["w2"], params["b2"]), params["g2"], params["be2"])
    x = jax.lax.reduce_window(x, -jnp.inf, jax.lax.max,
                              (1, 2, 2, 1), (1, 2, 2, 1), "VALID")
    return jnp.transpose(x, (0, 3, 1, 2))


if __name__ == "__main__":
    key = jax.random.PRNGKey(0)
    ks = jax.random.split(key, 9)

    N, Cin, H, W = 2, 3, 16, 16
    C1 = 64

    image = jax.random.normal(ks[0], (N, Cin, H, W), dtype=jnp.float32)

    params = {
        "w1": 0.1 * jax.random.normal(ks[1], (3, 3, Cin, C1), jnp.float32),
        "b1": 0.1 * jax.random.normal(ks[2], (C1,), jnp.float32),
        "g1": 1.0 + 0.1 * jax.random.normal(ks[3], (C1,), jnp.float32),
        "be1": 0.1 * jax.random.normal(ks[4], (C1,), jnp.float32),
        "w2": 0.05 * jax.random.normal(ks[5], (3, 3, C1, C1), jnp.float32),
        "b2": 0.1 * jax.random.normal(ks[6], (C1,), jnp.float32),
        "g2": 1.0 + 0.1 * jax.random.normal(ks[7], (C1,), jnp.float32),
        "be2": 0.1 * jax.random.normal(ks[8], (C1,), jnp.float32),
    }

    out = jax.block_until_ready(my_model_forward(image, params))
    ref = jax.block_until_ready(_ref_forward(image, params))

    assert out.shape == (N, C1, H // 2, W // 2), out.shape
    assert jnp.allclose(out, ref, atol=1e-3, rtol=1e-3), \
        float(jnp.max(jnp.abs(out - ref)))

    print("KERNEL_OK")
</pallas_src>

<mosaic_0001>
module attributes {stable_mosaic.version = 11 : i64} {
  func.func @_conv3x3_bn_stats_kernel(%arg0: i32, %arg1: memref<1x18x18x3xf32, #tpu.memory_space<vmem>>, %arg2: memref<3x9x64xf32, #tpu.memory_space<vmem>>, %arg3: memref<1x3xf32, #tpu.memory_space<vmem>>, %arg4: memref<1x3xf32, #tpu.memory_space<vmem>>, %arg5: memref<1x18x18x64xf32, #tpu.memory_space<vmem>>, %arg6: memref<1x2x64xf32, #tpu.memory_space<vmem>>) attributes {dimension_semantics = [#tpu.dimension_semantics<parallel>], iteration_bounds = array<i64: 2>, scalar_prefetch = 0 : i64, scratch_operands = 0 : i64, tpu.core_type = #tpu.core_type<tc>, window_params = [{transform_indices = @transform_0, window_bounds = array<i64: 1, 18, 18, 3>}, {pipeline_mode = #tpu.pipeline_mode<synchronous>, transform_indices = @transform_1, window_bounds = array<i64: 3, 9, 64>}, {pipeline_mode = #tpu.pipeline_mode<synchronous>, transform_indices = @transform_2, window_bounds = array<i64: 1, 3>}, {pipeline_mode = #tpu.pipeline_mode<synchronous>, transform_indices = @transform_3, window_bounds = array<i64: 1, 3>}, {transform_indices = @transform_4, window_bounds = array<i64: 1, 18, 18, 64>}, {transform_indices = @transform_5, window_bounds = array<i64: 1, 2, 64>}]} {
    %c0 = arith.constant 0 : index
    %c0_0 = arith.constant 0 : index
    %c0_1 = arith.constant 0 : index
    %c0_2 = arith.constant 0 : index
    %0 = vector.load %arg1[%c0, %c0_0, %c0_1, %c0_2] : memref<1x18x18x3xf32, #tpu.memory_space<vmem>>, vector<1x18x18x3xf32>
    %1 = vector.shape_cast %0 : vector<1x18x18x3xf32> to vector<18x18x3xf32>
    %2 = vector.extract_strided_slice %1 {offsets = [0, 0, 0], sizes = [16, 16, 3], strides = [1, 1, 1]} : vector<18x18x3xf32> to vector<16x16x3xf32>
    %3 = vector.extract_strided_slice %1 {offsets = [0, 1, 0], sizes = [16, 16, 3], strides = [1, 1, 1]} : vector<18x18x3xf32> to vector<16x16x3xf32>
    %4 = vector.extract_strided_slice %1 {offsets = [0, 2, 0], sizes = [16, 16, 3], strides = [1, 1, 1]} : vector<18x18x3xf32> to vector<16x16x3xf32>
    %5 = vector.extract_strided_slice %1 {offsets = [1, 0, 0], sizes = [16, 16, 3], strides = [1, 1, 1]} : vector<18x18x3xf32> to vector<16x16x3xf32>
    %6 = vector.extract_strided_slice %1 {offsets = [1, 1, 0], sizes = [16, 16, 3], strides = [1, 1, 1]} : vector<18x18x3xf32> to vector<16x16x3xf32>
    %7 = vector.extract_strided_slice %1 {offsets = [1, 2, 0], sizes = [16, 16, 3], strides = [1, 1, 1]} : vector<18x18x3xf32> to vector<16x16x3xf32>
    %8 = vector.extract_strided_slice %1 {offsets = [2, 0, 0], sizes = [16, 16, 3], strides = [1, 1, 1]} : vector<18x18x3xf32> to vector<16x16x3xf32>
    %9 = vector.extract_strided_slice %1 {offsets = [2, 1, 0], sizes = [16, 16, 3], strides = [1, 1, 1]} : vector<18x18x3xf32> to vector<16x16x3xf32>
    %10 = vector.extract_strided_slice %1 {offsets = [2, 2, 0], sizes = [16, 16, 3], strides = [1, 1, 1]} : vector<18x18x3xf32> to vector<16x16x3xf32>
    %11 = tpu.concatenate %2, %3, %4, %5, %6, %7, %8, %9, %10 in 2 : vector<16x16x3xf32>, vector<16x16x3xf32>, vector<16x16x3xf32>, vector<16x16x3xf32>, vector<16x16x3xf32>, vector<16x16x3xf32>, vector<16x16x3xf32>, vector<16x16x3xf32>, vector<16x16x3xf32> -> vector<16x16x27xf32>
    %12 = vector.shape_cast %11 : vector<16x16x27xf32> to vector<256x27xf32>
    %c0_3 = arith.constant 0 : index
    %c0_4 = arith.constant 0 : index
    %c0_5 = arith.constant 0 : index
    %13 = vector.load %arg2[%c0_3, %c0_4, %c0_5] : memref<3x9x64xf32, #tpu.memory_space<vmem>>, vector<3x9x64xf32>
    %14 = vector.shape_cast %13 : vector<3x9x64xf32> to vector<27x64xf32>
    %cst = arith.constant dense<0.000000e+00> : vector<256x64xf32>
    %15 = tpu.matmul %12, %14, %cst {dimension_numbers = #tpu.dot_dimension_numbers<[1], [0], [0], [1], [0, 0, 1, 1], [], []>} : vector<256x27xf32>, vector<27x64xf32>, vector<256x64xf32> -> vector<256x64xf32>
    %cst_6 = arith.constant dense<0.000000e+00> : vector<64xf32>
    %16 = vector.multi_reduction <add>, %15, %cst_6 [0] : vector<256x64xf32> to vector<64xf32>
    %17 = vector.shape_cast %16 : vector<64xf32> to vector<1x64xf32>
    %18 = arith.mulf %15, %15 : vector<256x64xf32>
    %cst_7 = arith.constant dense<0.000000e+00> : vector<64xf32>
    %19 = vector.multi_reduction <add>, %18, %cst_7 [0] : vector<256x64xf32> to vector<64xf32>
    %20 = vector.shape_cast %19 : vector<64xf32> to vector<1x64xf32>
    %21 = tpu.concatenate %17, %20 in 0 : vector<1x64xf32>, vector<1x64xf32> -> vector<2x64xf32>
    %c0_8 = arith.constant 0 : index
    %c0_9 = arith.constant 0 : index
    %c0_10 = arith.constant 0 : index
    %22 = vector.load %arg6[%c0_8, %c0_9, %c0_10] : memref<1x2x64xf32, #tpu.memory_space<vmem>>, vector<1x2x64xf32>
    %23 = vector.shape_cast %22 : vector<1x2x64xf32> to vector<2x64xf32>
    %24 = vector.shape_cast %21 : vector<2x64xf32> to vector<1x2x64xf32>
    tpu.vector_store %arg6[%c0_8, %c0_9, %c0_10], %24 {strides = array<i32>} : memref<1x2x64xf32, #tpu.memory_space<vmem>>, vector<1x2x64xf32>,
    %25 = vector.shape_cast %15 : vector<256x64xf32> to vector<16x16x64xf32>
    %cst_11 = arith.constant 0.000000e+00 : f32
    %26 = vector.broadcast %cst_11 : f32 to vector<16x1x64xf32>
    %cst_12 = arith.constant 0.000000e+00 : f32
    %27 = vector.broadcast %cst_12 : f32 to vector<1x18x64xf32>
    %28 = tpu.concatenate %26, %25, %26 in 1 : vector<16x1x64xf32>, vector<16x16x64xf32>, vector<16x1x64xf32> -> vector<16x18x64xf32>
    %29 = tpu.concatenate %27, %28, %27 in 0 : vector<1x18x64xf32>, vector<16x18x64xf32>, vector<1x18x64xf32> -> vector<18x18x64xf32>
    %c0_13 = arith.constant 0 : index
    %c0_14 = arith.constant 0 : index
    %c0_15 = arith.constant 0 : index
    %c0_16 = arith.constant 0 : index
    %30 = vector.load %arg5[%c0_13, %c0_14, %c0_15, %c0_16] : memref<1x18x18x64xf32, #tpu.memory_space<vmem>>, vector<1x18x18x64xf32>
    %31 = vector.shape_cast %30 : vector<1x18x18x64xf32> to vector<18x18x64xf32>
    %32 = vector.shape_cast %29 : vector<18x18x64xf32> to vector<1x18x18x64xf32>
    tpu.vector_store %arg5[%c0_13, %c0_14, %c0_15, %c0_16], %32 {strides = array<i32>} : memref<1x18x18x64xf32, #tpu.memory_space<vmem>>, vector<1x18x18x64xf32>,
    return
  }
  func.func @transform_0(%arg0: i32) -> (i32, i32, i32, i32) {
    %c0_i32 = arith.constant 0 : i32
    %c0_i32_0 = arith.constant 0 : i32
    %c0_i32_1 = arith.constant 0 : i32
    %c0_i32_2 = arith.constant 0 : i32
    return %arg0, %c0_i32, %c0_i32_0, %c0_i32_1 : i32, i32, i32, i32
  }
  func.func @transform_1(%arg0: i32) -> (i32, i32, i32) {
    %c0_i32 = arith.constant 0 : i32
    %c0_i32_0 = arith.constant 0 : i32
    %c0_i32_1 = arith.constant 0 : i32
    %c0_i32_2 = arith.constant 0 : i32
    return %c0_i32, %c0_i32_0, %c0_i32_1 : i32, i32, i32
  }
  func.func @transform_2(%arg0: i32) -> (i32, i32) {
    %c0_i32 = arith.constant 0 : i32
    %c0_i32_0 = arith.constant 0 : i32
    %c0_i32_1 = arith.constant 0 : i32
    return %c0_i32, %c0_i32_0 : i32, i32
  }
  func.func @transform_3(%arg0: i32) -> (i32, i32) {
    %c0_i32 = arith.constant 0 : i32
    %c0_i32_0 = arith.constant 0 : i32
    %c0_i32_1 = arith.constant 0 : i32
    return %c0_i32, %c0_i32_0 : i32, i32
  }
  func.func @transform_4(%arg0: i32) -> (i32, i32, i32, i32) {
    %c0_i32 = arith.constant 0 : i32
    %c0_i32_0 = arith.constant 0 : i32
    %c0_i32_1 = arith.constant 0 : i32
    %c0_i32_2 = arith.constant 0 : i32
    return %arg0, %c0_i32, %c0_i32_0, %c0_i32_1 : i32, i32, i32, i32
  }
  func.func @transform_5(%arg0: i32) -> (i32, i32, i32) {
    %c0_i32 = arith.constant 0 : i32
    %c0_i32_0 = arith.constant 0 : i32
    %c0_i32_1 = arith.constant 0 : i32
    return %arg0, %c0_i32, %c0_i32_0 : i32, i32, i32
  }
}

</mosaic_0001>

<llo_original>
// kernel: tpu_custom_call.1
$region0: #{tpu_custom_call.1}
  #allocation0 [shape = 'u32[]', space=smem, size = 0x4, offset = 0x4, fixed_abs, tag = 'smem constant byte address 0x4 - core index']
  #allocation1 [shape = 'u32[144,128]{1,0:T(1,128)}', space=vmem, size = 0x12000, scoped, tag = 'internal scratch']
  %s0 = inlined_call_operand.vmem [shape: f32[2,18,18,3], index: 0, kind: input, shape index: {}]
  %s1 = inlined_call_operand.vmem [shape: f32[3,9,64], index: 1, kind: input, shape index: {}]
  %s2 = inlined_call_operand.vmem [shape: f32[1,3], index: 2, kind: input, shape index: {}]
  %s3 = inlined_call_operand.vmem [shape: f32[1,3], index: 3, kind: input, shape index: {}]
  %s4 = inlined_call_operand.vmem [shape: f32[2,18,18,64], index: 4, kind: output, shape index: {0}]
  %s5 = inlined_call_operand.hbm [shape: f32[2,2,64], index: 5, kind: output, shape index: {1}]
  %6 = xla_tuple %s4, %s5
  %s7 = sld [smem:[#allocation0]]
  $region57: #{tpu_custom_call.1} parent=0
    _
  %s9 = ssub.s32 1, %s7
  %s10 = scalar_select 0, %s9, %s7
  $region1: #{tpu_custom_call.1} parent=0
    #allocation2 [shape = 'u8[2048]{0}', space=vmem, size = 0x800, scoped, tag = 'output window, operand 1']
    #allocation3 [shape = 's32[2]{0}', space=sflag, size = 0x8, scoped, tag = 'scoped memory for tpu_custom_call.1']
    %11 = vsyncpa [#allocation3], 0
    %s12 = scalar_lea.sflag [#allocation3], 1
    %13 = vsyncpa %s12, 0
    loop: start=0, step=1, limit=4
    $region2: #{tpu_custom_call.1} parent=1 // loop_pre_header
      _
    $region3: #{tpu_custom_call.1} parent=1 // loop_header
      %s15 = sphi 0, %s19
      %p16 = scmp.ge.s32.totalorder %s15, 4
      %s25 = sphi 0, %s27
      %s28 = sphi 0, %s25
      %s29 = sphi 0, %s28
      %s45 = sphi 0, %s29
      %s49 = sphi 0, %s49
      %s51 = sphi 0, %s49
      %s52 = sphi 0, %s51
      %s66 = sphi 0, %s52
      %s70 = sphi 0, %s70
      %s72 = sphi 0, %s70
      %s73 = sphi 0, %s72
      %s87 = sphi 0, %s73
      %s91 = sphi 0, %s91
      %s93 = sphi 0, %s91
      %s94 = sphi 0, %s93
      %s108 = sphi 0, %s94
      %s114 = sphi 0, %s116
      %s117 = sphi 0, %s114
      %s118 = sphi 0, %s117
      %s134 = sphi 0, %s118
      %s140 = sphi 0, %s142
      %s143 = sphi 0, %s140
      %s144 = sphi 0, %s143
      %s160 = sphi 0, %s144
    $region4: #{tpu_custom_call.1} parent=1 // loop_header_branch
      %18 = sbr.rel (%p16) target = $region8
    $region5: #{tpu_custom_call.1} parent=1 // loop_body
      %s20 = ssub.s32 %s15, 1
      %s21 = ssub.s32 %s15, 2
      %s22 = sadd.s32 %s15, 1
      %s23 = ssub.s32 %s15, %s22
      %p24 = scmp.eq.s32.totalorder %s23, 0
      %s26 = sadd.s32 %s25, 1
      %s27 = scalar_select %p24, %s25, %s26
      %p30 = pneg %p24
      %p31 = scmp.eq.s32.totalorder %s15, 1
      %p32 = por %p30, %p31
      %p33 = scmp.ne.s32.totalorder %s25, %s28
      %p34 = scmp.eq.s32.totalorder %s15, 0
      %p35 = por %p33, %p34
      %p36 = scmp.ne.s32.totalorder %s25, %s28
      %p37 = scmp.eq.s32.totalorder %s20, 1
      %p38 = por %p36, %p37
      %p39 = scmp.ne.s32.totalorder %s28, %s29
      %p40 = scmp.eq.s32.totalorder %s20, 0
      %p41 = por %p39, %p40
      %p42 = scmp.ne.s32.totalorder %s28, %s29
      %p43 = scmp.eq.s32.totalorder %s21, 1
      %p44 = por %p42, %p43
      %p46 = scmp.ne.s32.totalorder %s29, %s45
      %p47 = scmp.eq.s32.totalorder %s21, 0
      %p48 = por %p46, %p47
      %s50 = sadd.s32 %s49, 1
      %p53 = scmp.eq.s32.totalorder %s15, 1
      %p54 = scmp.ne.s32.totalorder %s49, %s51
      %p55 = scmp.eq.s32.totalorder %s15, 0
      %p56 = por %p54, %p55
      %p57 = scmp.ne.s32.totalorder %s49, %s51
      %p58 = scmp.eq.s32.totalorder %s20, 1
      %p59 = por %p57, %p58
      %p60 = scmp.ne.s32.totalorder %s51, %s52
      %p61 = scmp.eq.s32.totalorder %s20, 0
      %p62 = por %p60, %p61
      %p63 = scmp.ne.s32.totalorder %s51, %s52
      %p64 = scmp.eq.s32.totalorder %s21, 1
      %p65 = por %p63, %p64
      %p67 = scmp.ne.s32.totalorder %s52, %s66
      %p68 = scmp.eq.s32.totalorder %s21, 0
      %p69 = por %p67, %p68
      %s71 = sadd.s32 %s70, 1
      %p74 = scmp.eq.s32.totalorder %s15, 1
      %p75 = scmp.ne.s32.totalorder %s70, %s72
      %p76 = scmp.eq.s32.totalorder %s15, 0
      %p77 = por %p75, %p76
      %p78 = scmp.ne.s32.totalorder %s70, %s72
      %p79 = scmp.eq.s32.totalorder %s20, 1
      %p80 = por %p78, %p79
      %p81 = scmp.ne.s32.totalorder %s72, %s73
      %p82 = scmp.eq.s32.totalorder %s20, 0
      %p83 = por %p81, %p82
      %p84 = scmp.ne.s32.totalorder %s72, %s73
      %p85 = scmp.eq.s32.totalorder %s21, 1
      %p86 = por %p84, %p85
      %p88 = scmp.ne.s32.totalorder %s73, %s87
      %p89 = scmp.eq.s32.totalorder %s21, 0
      %p90 = por %p88, %p89
      %s92 = sadd.s32 %s91, 1
      %p95 = scmp.eq.s32.totalorder %s15, 1
      %p96 = scmp.ne.s32.totalorder %s91, %s93
      %p97 = scmp.eq.s32.totalorder %s15, 0
      %p98 = por %p96, %p97
      %p99 = scmp.ne.s32.totalorder %s91, %s93
      %p100 = scmp.eq.s32.totalorder %s20, 1
      %p101 = por %p99, %p100
      %p102 = scmp.ne.s32.totalorder %s93, %s94
      %p103 = scmp.eq.s32.totalorder %s20, 0
      %p104 = por %p102, %p103
      %p105 = scmp.ne.s32.totalorder %s93, %s94
      %p106 = scmp.eq.s32.totalorder %s21, 1
      %p107 = por %p105, %p106
      %p109 = scmp.ne.s32.totalorder %s94, %s108
      %p110 = scmp.eq.s32.totalorder %s21, 0
      %p111 = por %p109, %p110
      %s112 = ssub.s32 %s15, %s22
      %p113 = scmp.eq.s32.totalorder %s112, 0
      %s115 = sadd.s32 %s114, 1
      %s116 = scalar_select %p113, %s114, %s115
      %p119 = pneg %p113
      %p120 = scmp.eq.s32.totalorder %s15, 1
      %p121 = por %p119, %p120
      %p122 = scmp.ne.s32.totalorder %s114, %s117
      %p123 = scmp.eq.s32.totalorder %s15, 0
      %p124 = por %p122, %p123
      %p125 = scmp.ne.s32.totalorder %s114, %s117
      %p126 = scmp.eq.s32.totalorder %s20, 1
      %p127 = por %p125, %p126
      %p128 = scmp.ne.s32.totalorder %s117, %s118
      %p129 = scmp.eq.s32.totalorder %s20, 0
      %p130 = por %p128, %p129
      %p131 = scmp.ne.s32.totalorder %s117, %s118
      %p132 = scmp.eq.s32.totalorder %s21, 1
      %p133 = por %p131, %p132
      %p135 = scmp.ne.s32.totalorder %s118, %s134
      %p136 = scmp.eq.s32.totalorder %s21, 0
      %p137 = por %p135, %p136
      %s138 = ssub.s32 %s15, %s22
      %p139 = scmp.eq.s32.totalorder %s138, 0
      %s141 = sadd.s32 %s140, 1
      %s142 = scalar_select %p139, %s140, %s141
      %p145 = pneg %p139
      %p146 = scmp.eq.s32.totalorder %s15, 1
      %p147 = por %p145, %p146
      %p148 = scmp.ne.s32.totalorder %s140, %s143
      %p149 = scmp.eq.s32.totalorder %s15, 0
      %p150 = por %p148, %p149
      %p151 = scmp.ne.s32.totalorder %s140, %s143
      %p152 = scmp.eq.s32.totalorder %s20, 1
      %p153 = por %p151, %p152
      %p154 = scmp.ne.s32.totalorder %s143, %s144
      %p155 = scmp.eq.s32.totalorder %s20, 0
      %p156 = por %p154, %p155
      %p157 = scmp.ne.s32.totalorder %s143, %s144
      %p158 = scmp.eq.s32.totalorder %s21, 1
      %p159 = por %p157, %p158
      %p161 = scmp.ne.s32.totalorder %s144, %s160
      %p162 = scmp.eq.s32.totalorder %s21, 0
      %p163 = por %p161, %p162
      %p164 = scmp.le.s32.totalorder 1, %s15
      %p165 = scmp.lt.s32.totalorder %s15, 3
      %p166 = pnand %p164, %p165
      %p167 = pneg %p166
      // Predicated region
      $region9: #{tpu_custom_call.1} parent=5 // pred_check
        _
      $region10: #{tpu_custom_call.1} parent=5 // pred_check_branch
        %169 = sbr.rel (%p166) target = $region12
      $region11: #{tpu_custom_call.1} parent=5 // pred_region
        %s170 = ssub.s32 %s15, 1
        // Predicated region
        $region13: #{tpu_custom_call.1} parent=11 // pred_check
          %p171 = pneg %p62
        $region14: #{tpu_custom_call.1} parent=11 // pred_check_branch
          %173 = sbr.rel (%p171) target = $region16
        $region15: #{tpu_custom_call.1} parent=11 // pred_region
          _
        $region16: #{tpu_custom_call.1} parent=11 // pred_fallthru
          _
        // Predicated region
        $region17: #{tpu_custom_call.1} parent=11 // pred_check
          %p174 = pneg %p83
        $region18: #{tpu_custom_call.1} parent=11 // pred_check_branch
          %176 = sbr.rel (%p174) target = $region20
        $region19: #{tpu_custom_call.1} parent=11 // pred_region
          _
        $region20: #{tpu_custom_call.1} parent=11 // pred_fallthru
          _
        // Predicated region
        $region21: #{tpu_custom_call.1} parent=11 // pred_check
          %p177 = pneg %p104
        $region22: #{tpu_custom_call.1} parent=11 // pred_check_branch
          %179 = sbr.rel (%p177) target = $region24
        $region23: #{tpu_custom_call.1} parent=11 // pred_region
          _
        $region24: #{tpu_custom_call.1} parent=11 // pred_fallthru
          _
      $region12: #{tpu_custom_call.1} parent=5 // pred_fallthru
        _
      %p180 = scmp.lt.s32.totalorder %s15, 2
      // Predicated region
      $region25: #{tpu_custom_call.1} parent=5 // pred_check
        %p181 = pneg %p180
      $region26: #{tpu_custom_call.1} parent=5 // pred_check_branch
        %183 = sbr.rel (%p181) target = $region28
      $region27: #{tpu_custom_call.1} parent=5 // pred_region
        // Predicated region
        $region29: #{tpu_custom_call.1} parent=27 // pred_check
          %p184 = pneg %p35
        $region30: #{tpu_custom_call.1} parent=27 // pred_check_branch
          %186 = sbr.rel (%p184) target = $region32
        $region31: #{tpu_custom_call.1} parent=27 // pred_region
          %p187 = scmp.lt.s32.totalorder %s15, 1
          %s188 = scalar_select %p187, %s15, 1
          %s189 = smul.addr %s188, 54
          %s190 = smul.addr %s189, 8
          %s191 = scalar_lea.vmem %s0, %s190
        $region32: #{tpu_custom_call.1} parent=27 // pred_fallthru
          _
      $region28: #{tpu_custom_call.1} parent=5 // pred_fallthru
        _
      %p192 = scmp.le.s32.totalorder 1, %s15
      %p193 = scmp.lt.s32.totalorder %s15, 3
      %p194 = pnand %p192, %p193
      %p195 = pneg %p194
      // Predicated region
      $region33: #{tpu_custom_call.1} parent=5 // pred_check
        _
      $region34: #{tpu_custom_call.1} parent=5 // pred_check_branch
        %197 = sbr.rel (%p194) target = $region36
      $region35: #{tpu_custom_call.1} parent=5 // pred_region
        %s198 = ssub.s32 %s15, 1
        %p199 = scmp.lt.s32.totalorder %s20, 1
        %s200 = scalar_select %p199, %s20, 1
        %s201 = smul.addr %s200, 54
        %s202 = smul.addr %s201, 8
        %s203 = scalar_lea.vmem %s0, %s202
        %p204 = pneg %p41
        %p205 = pneg %p38
        %p206 = pneg %p62
        %p207 = pneg %p59
        %p208 = pneg %p83
        %p209 = pneg %p80
        %p210 = pneg %p104
        %p211 = pneg %p101
        %p212 = pneg %p130
        %p213 = pneg %p127
        %p214 = scmp.lt.s32.totalorder %s20, 1
        %s215 = scalar_select %p214, %s20, 1
        %s216 = smul.addr %s215, 54
        %s217 = smul.addr %s216, 8
        %s218 = scalar_lea.vmem %s4, %s217
        %p219 = pneg %p156
        %p220 = pneg %p153
        %s221 = sand.u32 %s143, 1
        %s222 = scalar_lea.sflag [#allocation3], %s221
        %s223 = sand.u32 %s143, 1
        %s224 = smul.addr %s223, 2
        %s225 = scalar_lea.vmem [#allocation2], %s224
        %p226 = scmp.lt.s32.totalorder %s20, 1
        %s227 = scalar_select %p226, %s20, 1
        %s228 = smul.addr %s227, 54
        %s229 = smul.addr %s228, 8
        %s230 = scalar_lea.vmem %s0, %s229
        %p231 = scmp.lt.s32.totalorder %s20, 1
        %s232 = scalar_select %p231, %s20, 1
        %s233 = smul.addr %s232, 54
        %s234 = smul.addr %s233, 8
        %s235 = scalar_lea.vmem %s4, %s234
        %v236 = vld [vmem:[%s230] sm:$0xff]
        %v237 = vld [vmem:[%s230 + $0x8] sm:$0xff]
        %v238 = vld [vmem:[%s230 + $0x10] sm:$0x3]
        %v239 = vld [vmem:[%s230 + $0x18] sm:$0xff]
        %v240 = vld [vmem:[%s230 + $0x20] sm:$0xff]
        %v241 = vld [vmem:[%s230 + $0x28] sm:$0x3]
        %v242 = vld [vmem:[%s230 + $0x30] sm:$0xff]
        %v243 = vld [vmem:[%s230 + $0x38] sm:$0xff]
        %v244 = vld [vmem:[%s230 + $0x40] sm:$0x3]
        %v245 = vld [vmem:[%s230 + $0x48] sm:$0xff]
        %v246 = vld [vmem:[%s230 + $0x50] sm:$0xff]
        %v247 = vld [vmem:[%s230 + $0x58] sm:$0x3]
        %v248 = vld [vmem:[%s230 + $0x60] sm:$0xff]
        %v249 = vld [vmem:[%s230 + $0x68] sm:$0xff]
        %v250 = vld [vmem:[%s230 + $0x70] sm:$0x3]
        %v251 = vld [vmem:[%s230 + $0x78] sm:$0xff]
        %v252 = vld [vmem:[%s230 + $0x80] sm:$0xff]
        %v253 = vld [vmem:[%s230 + $0x88] sm:$0x3]
        %v254 = vld [vmem:[%s230 + $0x90] sm:$0xff]
        %v255 = vld [vmem:[%s230 + $0x98] sm:$0xff]
        %v256 = vld [vmem:[%s230 + $0xa0] sm:$0x3]
        %v257 = vld [vmem:[%s230 + $0xa8] sm:$0xff]
        %v258 = vld [vmem:[%s230 + $0xb0] sm:$0xff]
        %v259 = vld [vmem:[%s230 + $0xb8] sm:$0x3]
        %v260 = vld [vmem:[%s230 + $0xc0] sm:$0xff]
        %v261 = vld [vmem:[%s230 + $0xc8] sm:$0xff]
        %v262 = vld [vmem:[%s230 + $0xd0] sm:$0x3]
        %v263 = vld [vmem:[%s230 + $0xd8] sm:$0xff]
        %v264 = vld [vmem:[%s230 + $0xe0] sm:$0xff]
        %v265 = vld [vmem:[%s230 + $0xe8] sm:$0x3]
        %v266 = vld [vmem:[%s230 + $0xf0] sm:$0xff]
        %v267 = vld [vmem:[%s230 + $0xf8] sm:$0xff]
        %v268 = vld [vmem:[%s230 + $0x100] sm:$0x3]
        %v269 = vld [vmem:[%s230 + $0x108] sm:$0xff]
        %v270 = vld [vmem:[%s230 + $0x110] sm:$0xff]
        %v271 = vld [vmem:[%s230 + $0x118] sm:$0x3]
        %v272 = vld [vmem:[%s230 + $0x120] sm:$0xff]
        %v273 = vld [vmem:[%s230 + $0x128] sm:$0xff]
        %v274 = vld [vmem:[%s230 + $0x130] sm:$0x3]
        %v275 = vld [vmem:[%s230 + $0x138] sm:$0xff]
        %v276 = vld [vmem:[%s230 + $0x140] sm:$0xff]
        %v277 = vld [vmem:[%s230 + $0x148] sm:$0x3]
        %v278 = vld [vmem:[%s230 + $0x150] sm:$0xff]
        %v279 = vld [vmem:[%s230 + $0x158] sm:$0xff]
        %v280 = vld [vmem:[%s230 + $0x160] sm:$0x3]
        %v281 = vld [vmem:[%s230 + $0x168] sm:$0xff]
        %v282 = vld [vmem:[%s230 + $0x170] sm:$0xff]
        %v283 = vld [vmem:[%s230 + $0x178] sm:$0x3]
        %v284 = vld [vmem:[%s230 + $0x180] sm:$0xff]
        %v285 = vld [vmem:[%s230 + $0x188] sm:$0xff]
        %v286 = vld [vmem:[%s230 + $0x190] sm:$0x3]
        %v287 = vld [vmem:[%s230 + $0x198] sm:$0xff]
        %v288 = vld [vmem:[%s230 + $0x1a0] sm:$0xff]
        %v289 = vld [vmem:[%s230 + $0x1a8] sm:$0x3]
        %vm338 = vcmask 1046528
        %v339 = vrot.slane %v236, 1
        %v340 = vrot.slane %v237, 1
        %v341 = vsel %vm338, %v339, %v340
        %v342 = vrot.slane %v238, 1
        %v343 = vsel %vm338, %v340, %v342
        %v344 = vrot.slane %v239, 1
        %v345 = vrot.slane %v240, 1
        %v346 = vsel %vm338, %v344, %v345
        %v347 = vrot.slane %v241, 1
        %v348 = vsel %vm338, %v345, %v347
        %v349 = vrot.slane %v242, 1
        %v350 = vrot.slane %v243, 1
        %v351 = vsel %vm338, %v349, %v350
        %v352 = vrot.slane %v244, 1
        %v353 = vsel %vm338, %v350, %v352
        %v354 = vrot.slane %v245, 1
        %v355 = vrot.slane %v246, 1
        %v356 = vsel %vm338, %v354, %v355
        %v357 = vrot.slane %v247, 1
        %v358 = vsel %vm338, %v355, %v357
        %v359 = vrot.slane %v248, 1
        %v360 = vrot.slane %v249, 1
        %v361 = vsel %vm338, %v359, %v360
        %v362 = vrot.slane %v250, 1
        %v363 = vsel %vm338, %v360, %v362
        %v364 = vrot.slane %v251, 1
        %v365 = vrot.slane %v252, 1
        %v366 = vsel %vm338, %v364, %v365
        %v367 = vrot.slane %v253, 1
        %v368 = vsel %vm338, %v365, %v367
        %v369 = vrot.slane %v254, 1
        %v370 = vrot.slane %v255, 1
        %v371 = vsel %vm338, %v369, %v370
        %v372 = vrot.slane %v256, 1
        %v373 = vsel %vm338, %v370, %v372
        %v374 = vrot.slane %v257, 1
        %v375 = vrot.slane %v258, 1
        %v376 = vsel %vm338, %v374, %v375
        %v377 = vrot.slane %v259, 1
        %v378 = vsel %vm338, %v375, %v377
        %v379 = vrot.slane %v260, 1
        %v380 = vrot.slane %v261, 1
        %v381 = vsel %vm338, %v379, %v380
        %v382 = vrot.slane %v262, 1
        %v383 = vsel %vm338, %v380, %v382
        %v384 = vrot.slane %v263, 1
        %v385 = vrot.slane %v264, 1
        %v386 = vsel %vm338, %v384, %v385
        %v387 = vrot.slane %v265, 1
        %v388 = vsel %vm338, %v385, %v387
        %v389 = vrot.slane %v266, 1
        %v390 = vrot.slane %v267, 1
        %v391 = vsel %vm338, %v389, %v390
        %v392 = vrot.slane %v268, 1
        %v393 = vsel %vm338, %v390, %v392
        %v394 = vrot.slane %v269, 1
        %v395 = vrot.slane %v270, 1
        %v396 = vsel %vm338, %v394, %v395
        %v397 = vrot.slane %v271, 1
        %v398 = vsel %vm338, %v395, %v397
        %v399 = vrot.slane %v272, 1
        %v400 = vrot.slane %v273, 1
        %v401 = vsel %vm338, %v399, %v400
        %v402 = vrot.slane %v274, 1
        %v403 = vsel %vm338, %v400, %v402
        %v404 = vrot.slane %v275, 1
        %v405 = vrot.slane %v276, 1
        %v406 = vsel %vm338, %v404, %v405
        %v407 = vrot.slane %v277, 1
        %v408 = vsel %vm338, %v405, %v407
        %v409 = vrot.slane %v278, 1
        %v410 = vrot.slane %v279, 1
        %v411 = vsel %vm338, %v409, %v410
        %v412 = vrot.slane %v280, 1
        %v413 = vsel %vm338, %v410, %v412
        %v414 = vrot.slane %v281, 1
        %v415 = vrot.slane %v282, 1
        %v416 = vsel %vm338, %v414, %v415
        %v417 = vrot.slane %v283, 1
        %v418 = vsel %vm338, %v415, %v417
        %419 = vrot.lane.b32.xlu0 %v341, 3
        %v420 = vpop.permute.xlu0 %419
        %421 = vrot.lane.b32.xlu0 %v343, 3
        %v422 = vpop.permute.xlu0 %421
        %423 = vrot.lane.b32.xlu0 %v346, 3
        %v424 = vpop.permute.xlu0 %423
        %425 = vrot.lane.b32.xlu0 %v348, 3
        %v426 = vpop.permute.xlu0 %425
        %427 = vrot.lane.b32.xlu0 %v351, 3
        %v428 = vpop.permute.xlu0 %427
        %429 = vrot.lane.b32.xlu0 %v353, 3
        %v430 = vpop.permute.xlu0 %429
        %431 = vrot.lane.b32.xlu0 %v356, 3
        %v432 = vpop.permute.xlu0 %431
        %433 = vrot.lane.b32.xlu0 %v358, 3
        %v434 = vpop.permute.xlu0 %433
        %435 = vrot.lane.b32.xlu0 %v361, 3
        %v436 = vpop.permute.xlu0 %435
        %437 = vrot.lane.b32.xlu0 %v363, 3
        %v438 = vpop.permute.xlu0 %437
        %439 = vrot.lane.b32.xlu0 %v366, 3
        %v440 = vpop.permute.xlu0 %439
        %441 = vrot.lane.b32.xlu0 %v368, 3
        %v442 = vpop.permute.xlu0 %441
        %443 = vrot.lane.b32.xlu0 %v371, 3
        %v444 = vpop.permute.xlu0 %443
        %445 = vrot.lane.b32.xlu0 %v373, 3
        %v446 = vpop.permute.xlu0 %445
        %447 = vrot.lane.b32.xlu0 %v376, 3
        %v448 = vpop.permute.xlu0 %447
        %449 = vrot.lane.b32.xlu0 %v378, 3
        %v450 = vpop.permute.xlu0 %449
        %451 = vrot.lane.b32.xlu0 %v381, 3
        %v452 = vpop.permute.xlu0 %451
        %453 = vrot.lane.b32.xlu0 %v383, 3
        %v454 = vpop.permute.xlu0 %453
        %455 = vrot.lane.b32.xlu0 %v386, 3
        %v456 = vpop.permute.xlu0 %455
        %457 = vrot.lane.b32.xlu0 %v388, 3
        %v458 = vpop.permute.xlu0 %457
        %459 = vrot.lane.b32.xlu0 %v391, 3
        %v460 = vpop.permute.xlu0 %459
        %461 = vrot.lane.b32.xlu0 %v393, 3
        %v462 = vpop.permute.xlu0 %461
        %463 = vrot.lane.b32.xlu0 %v396, 3
        %v464 = vpop.permute.xlu0 %463
        %465 = vrot.lane.b32.xlu0 %v398, 3
        %v466 = vpop.permute.xlu0 %465
        %467 = vrot.lane.b32.xlu0 %v401, 3
        %v468 = vpop.permute.xlu0 %467
        %469 = vrot.lane.b32.xlu0 %v403, 3
        %v470 = vpop.permute.xlu0 %469
        %471 = vrot.lane.b32.xlu0 %v406, 3
        %v472 = vpop.permute.xlu0 %471
        %473 = vrot.lane.b32.xlu0 %v408, 3
        %v474 = vpop.permute.xlu0 %473
        %475 = vrot.lane.b32.xlu0 %v411, 3
        %v476 = vpop.permute.xlu0 %475
        %477 = vrot.lane.b32.xlu0 %v413, 3
        %v478 = vpop.permute.xlu0 %477
        %479 = vrot.lane.b32.xlu0 %v416, 3
        %v480 = vpop.permute.xlu0 %479
        %481 = vrot.lane.b32.xlu0 %v418, 3
        %v482 = vpop.permute.xlu0 %481
        %vm515 = vcmask 1045504
        %v516 = vrot.slane %v236, 2
        %v517 = vrot.slane %v237, 2
        %v518 = vsel %vm515, %v516, %v517
        %v519 = vrot.slane %v238, 2
        %v520 = vsel %vm515, %v517, %v519
        %v521 = vrot.slane %v239, 2
        %v522 = vrot.slane %v240, 2
        %v523 = vsel %vm515, %v521, %v522
        %v524 = vrot.slane %v241, 2
        %v525 = vsel %vm515, %v522, %v524
        %v526 = vrot.slane %v242, 2
        %v527 = vrot.slane %v243, 2
        %v528 = vsel %vm515, %v526, %v527
        %v529 = vrot.slane %v244, 2
        %v530 = vsel %vm515, %v527, %v529
        %v531 = vrot.slane %v245, 2
        %v532 = vrot.slane %v246, 2
        %v533 = vsel %vm515, %v531, %v532
        %v534 = vrot.slane %v247, 2
        %v535 = vsel %vm515, %v532, %v534
        %v536 = vrot.slane %v248, 2
        %v537 = vrot.slane %v249, 2
        %v538 = vsel %vm515, %v536, %v537
        %v539 = vrot.slane %v250, 2
        %v540 = vsel %vm515, %v537, %v539
        %v541 = vrot.slane %v251, 2
        %v542 = vrot.slane %v252, 2
        %v543 = vsel %vm515, %v541, %v542
        %v544 = vrot.slane %v253, 2
        %v545 = vsel %vm515, %v542, %v544
        %v546 = vrot.slane %v254, 2
        %v547 = vrot.slane %v255, 2
        %v548 = vsel %vm515, %v546, %v547
        %v549 = vrot.slane %v256, 2
        %v550 = vsel %vm515, %v547, %v549
        %v551 = vrot.slane %v257, 2
        %v552 = vrot.slane %v258, 2
        %v553 = vsel %vm515, %v551, %v552
        %v554 = vrot.slane %v259, 2
        %v555 = vsel %vm515, %v552, %v554
        %v556 = vrot.slane %v260, 2
        %v557 = vrot.slane %v261, 2
        %v558 = vsel %vm515, %v556, %v557
        %v559 = vrot.slane %v262, 2
        %v560 = vsel %vm515, %v557, %v559
        %v561 = vrot.slane %v263, 2
        %v562 = vrot.slane %v264, 2
        %v563 = vsel %vm515, %v561, %v562
        %v564 = vrot.slane %v265, 2
        %v565 = vsel %vm515, %v562, %v564
        %v566 = vrot.slane %v266, 2
        %v567 = vrot.slane %v267, 2
        %v568 = vsel %vm515, %v566, %v567
        %v569 = vrot.slane %v268, 2
        %v570 = vsel %vm515, %v567, %v569
        %v571 = vrot.slane %v269, 2
        %v572 = vrot.slane %v270, 2
        %v573 = vsel %vm515, %v571, %v572
        %v574 = vrot.slane %v271, 2
        %v575 = vsel %vm515, %v572, %v574
        %v576 = vrot.slane %v272, 2
        %v577 = vrot.slane %v273, 2
        %v578 = vsel %vm515, %v576, %v577
        %v579 = vrot.slane %v274, 2
        %v580 = vsel %vm515, %v577, %v579
        %v581 = vrot.slane %v275, 2
        %v582 = vrot.slane %v276, 2
        %v583 = vsel %vm515, %v581, %v582
        %v584 = vrot.slane %v277, 2
        %v585 = vsel %vm515, %v582, %v584
        %v586 = vrot.slane %v278, 2
        %v587 = vrot.slane %v279, 2
        %v588 = vsel %vm515, %v586, %v587
        %v589 = vrot.slane %v280, 2
        %v590 = vsel %vm515, %v587, %v589
        %v591 = vrot.slane %v281, 2
        %v592 = vrot.slane %v282, 2
        %v593 = vsel %vm515, %v591, %v592
        %v594 = vrot.slane %v283, 2
        %v595 = vsel %vm515, %v592, %v594
        %596 = vrot.lane.b32.xlu0 %v518, 6
        %v597 = vpop.permute.xlu0 %596
        %598 = vrot.lane.b32.xlu0 %v520, 6
        %v599 = vpop.permute.xlu0 %598
        %600 = vrot.lane.b32.xlu0 %v523, 6
        %v601 = vpop.permute.xlu0 %600
        %602 = vrot.lane.b32.xlu0 %v525, 6
        %v603 = vpop.permute.xlu0 %602
        %604 = vrot.lane.b32.xlu0 %v528, 6
        %v605 = vpop.permute.xlu0 %604
        %606 = vrot.lane.b32.xlu0 %v530, 6
        %v607 = vpop.permute.xlu0 %606
        %608 = vrot.lane.b32.xlu0 %v533, 6
        %v609 = vpop.permute.xlu0 %608
        %610 = vrot.lane.b32.xlu0 %v535, 6
        %v611 = vpop.permute.xlu0 %610
        %612 = vrot.lane.b32.xlu0 %v538, 6
        %v613 = vpop.permute.xlu0 %612
        %614 = vrot.lane.b32.xlu0 %v540, 6
        %v615 = vpop.permute.xlu0 %614
        %616 = vrot.lane.b32.xlu0 %v543, 6
        %v617 = vpop.permute.xlu0 %616
        %618 = vrot.lane.b32.xlu0 %v545, 6
        %v619 = vpop.permute.xlu0 %618
        %620 = vrot.lane.b32.xlu0 %v548, 6
        %v621 = vpop.permute.xlu0 %620
        %622 = vrot.lane.b32.xlu0 %v550, 6
        %v623 = vpop.permute.xlu0 %622
        %624 = vrot.lane.b32.xlu0 %v553, 6
        %v625 = vpop.permute.xlu0 %624
        %626 = vrot.lane.b32.xlu0 %v555, 6
        %v627 = vpop.permute.xlu0 %626
        %628 = vrot.lane.b32.xlu0 %v558, 6
        %v629 = vpop.permute.xlu0 %628
        %630 = vrot.lane.b32.xlu0 %v560, 6
        %v631 = vpop.permute.xlu0 %630
        %632 = vrot.lane.b32.xlu0 %v563, 6
        %v633 = vpop.permute.xlu0 %632
        %634 = vrot.lane.b32.xlu0 %v565, 6
        %v635 = vpop.permute.xlu0 %634
        %636 = vrot.lane.b32.xlu0 %v568, 6
        %v637 = vpop.permute.xlu0 %636
        %638 = vrot.lane.b32.xlu0 %v570, 6
        %v639 = vpop.permute.xlu0 %638
        %640 = vrot.lane.b32.xlu0 %v573, 6
        %v641 = vpop.permute.xlu0 %640
        %642 = vrot.lane.b32.xlu0 %v575, 6
        %v643 = vpop.permute.xlu0 %642
        %644 = vrot.lane.b32.xlu0 %v578, 6
        %v645 = vpop.permute.xlu0 %644
        %646 = vrot.lane.b32.xlu0 %v580, 6
        %v647 = vpop.permute.xlu0 %646
        %648 = vrot.lane.b32.xlu0 %v583, 6
        %v649 = vpop.permute.xlu0 %648
        %650 = vrot.lane.b32.xlu0 %v585, 6
        %v651 = vpop.permute.xlu0 %650
        %652 = vrot.lane.b32.xlu0 %v588, 6
        %v653 = vpop.permute.xlu0 %652
        %654 = vrot.lane.b32.xlu0 %v590, 6
        %v655 = vpop.permute.xlu0 %654
        %656 = vrot.lane.b32.xlu0 %v593, 6
        %v657 = vpop.permute.xlu0 %656
        %658 = vrot.lane.b32.xlu0 %v595, 6
        %v659 = vpop.permute.xlu0 %658
        %694 = vrot.lane.b32.xlu0 %v239, 9
        %v695 = vpop.permute.xlu0 %694
        %696 = vrot.lane.b32.xlu0 %v240, 9
        %v697 = vpop.permute.xlu0 %696
        %698 = vrot.lane.b32.xlu0 %v242, 9
        %v699 = vpop.permute.xlu0 %698
        %700 = vrot.lane.b32.xlu0 %v243, 9
        %v701 = vpop.permute.xlu0 %700
        %702 = vrot.lane.b32.xlu0 %v245, 9
        %v703 = vpop.permute.xlu0 %702
        %704 = vrot.lane.b32.xlu0 %v246, 9
        %v705 = vpop.permute.xlu0 %704
        %706 = vrot.lane.b32.xlu0 %v248, 9
        %v707 = vpop.permute.xlu0 %706
        %708 = vrot.lane.b32.xlu0 %v249, 9
        %v709 = vpop.permute.xlu0 %708
        %710 = vrot.lane.b32.xlu0 %v251, 9
        %v711 = vpop.permute.xlu0 %710
        %712 = vrot.lane.b32.xlu0 %v252, 9
        %v713 = vpop.permute.xlu0 %712
        %714 = vrot.lane.b32.xlu0 %v254, 9
        %v715 = vpop.permute.xlu0 %714
        %716 = vrot.lane.b32.xlu0 %v255, 9
        %v717 = vpop.permute.xlu0 %716
        %718 = vrot.lane.b32.xlu0 %v257, 9
        %v719 = vpop.permute.xlu0 %718
        %720 = vrot.lane.b32.xlu0 %v258, 9
        %v721 = vpop.permute.xlu0 %720
        %722 = vrot.lane.b32.xlu0 %v260, 9
        %v723 = vpop.permute.xlu0 %722
        %724 = vrot.lane.b32.xlu0 %v261, 9
        %v725 = vpop.permute.xlu0 %724
        %726 = vrot.lane.b32.xlu0 %v263, 9
        %v727 = vpop.permute.xlu0 %726
        %728 = vrot.lane.b32.xlu0 %v264, 9
        %v729 = vpop.permute.xlu0 %728
        %730 = vrot.lane.b32.xlu0 %v266, 9
        %v731 = vpop.permute.xlu0 %730
        %732 = vrot.lane.b32.xlu0 %v267, 9
        %v733 = vpop.permute.xlu0 %732
        %734 = vrot.lane.b32.xlu0 %v269, 9
        %v735 = vpop.permute.xlu0 %734
        %736 = vrot.lane.b32.xlu0 %v270, 9
        %v737 = vpop.permute.xlu0 %736
        %738 = vrot.lane.b32.xlu0 %v272, 9
        %v739 = vpop.permute.xlu0 %738
        %740 = vrot.lane.b32.xlu0 %v273, 9
        %v741 = vpop.permute.xlu0 %740
        %742 = vrot.lane.b32.xlu0 %v275, 9
        %v743 = vpop.permute.xlu0 %742
        %744 = vrot.lane.b32.xlu0 %v276, 9
        %v745 = vpop.permute.xlu0 %744
        %746 = vrot.lane.b32.xlu0 %v278, 9
        %v747 = vpop.permute.xlu0 %746
        %748 = vrot.lane.b32.xlu0 %v279, 9
        %v749 = vpop.permute.xlu0 %748
        %750 = vrot.lane.b32.xlu0 %v281, 9
        %v751 = vpop.permute.xlu0 %750
        %752 = vrot.lane.b32.xlu0 %v282, 9
        %v753 = vpop.permute.xlu0 %752
        %754 = vrot.lane.b32.xlu0 %v284, 9
        %v755 = vpop.permute.xlu0 %754
        %756 = vrot.lane.b32.xlu0 %v285, 9
        %v757 = vpop.permute.xlu0 %756
        %v791 = vrot.slane %v284, 1
        %v792 = vrot.slane %v285, 1
        %v793 = vsel %vm338, %v791, %v792
        %v794 = vrot.slane %v286, 1
        %v795 = vsel %vm338, %v792, %v794
        %796 = vrot.lane.b32.xlu0 %v346, 12
        %v797 = vpop.permute.xlu0 %796
        %798 = vrot.lane.b32.xlu0 %v348, 12
        %v799 = vpop.permute.xlu0 %798
        %800 = vrot.lane.b32.xlu0 %v351, 12
        %v801 = vpop.permute.xlu0 %800
        %802 = vrot.lane.b32.xlu0 %v353, 12
        %v803 = vpop.permute.xlu0 %802
        %804 = vrot.lane.b32.xlu0 %v356, 12
        %v805 = vpop.permute.xlu0 %804
        %806 = vrot.lane.b32.xlu0 %v358, 12
        %v807 = vpop.permute.xlu0 %806
        %808 = vrot.lane.b32.xlu0 %v361, 12
        %v809 = vpop.permute.xlu0 %808
        %810 = vrot.lane.b32.xlu0 %v363, 12
        %v811 = vpop.permute.xlu0 %810
        %812 = vrot.lane.b32.xlu0 %v366, 12
        %v813 = vpop.permute.xlu0 %812
        %814 = vrot.lane.b32.xlu0 %v368, 12
        %v815 = vpop.permute.xlu0 %814
        %816 = vrot.lane.b32.xlu0 %v371, 12
        %v817 = vpop.permute.xlu0 %816
        %818 = vrot.lane.b32.xlu0 %v373, 12
        %v819 = vpop.permute.xlu0 %818
        %820 = vrot.lane.b32.xlu0 %v376, 12
        %v821 = vpop.permute.xlu0 %820
        %822 = vrot.lane.b32.xlu0 %v378, 12
        %v823 = vpop.permute.xlu0 %822
        %824 = vrot.lane.b32.xlu0 %v381, 12
        %v825 = vpop.permute.xlu0 %824
        %826 = vrot.lane.b32.xlu0 %v383, 12
        %v827 = vpop.permute.xlu0 %826
        %828 = vrot.lane.b32.xlu0 %v386, 12
        %v829 = vpop.permute.xlu0 %828
        %830 = vrot.lane.b32.xlu0 %v388, 12
        %v831 = vpop.permute.xlu0 %830
        %832 = vrot.lane.b32.xlu0 %v391, 12
        %v833 = vpop.permute.xlu0 %832
        %834 = vrot.lane.b32.xlu0 %v393, 12
        %v835 = vpop.permute.xlu0 %834
        %836 = vrot.lane.b32.xlu0 %v396, 12
        %v837 = vpop.permute.xlu0 %836
        %838 = vrot.lane.b32.xlu0 %v398, 12
        %v839 = vpop.permute.xlu0 %838
        %840 = vrot.lane.b32.xlu0 %v401, 12
        %v841 = vpop.permute.xlu0 %840
        %842 = vrot.lane.b32.xlu0 %v403, 12
        %v843 = vpop.permute.xlu0 %842
        %844 = vrot.lane.b32.xlu0 %v406, 12
        %v845 = vpop.permute.xlu0 %844
        %846 = vrot.lane.b32.xlu0 %v408, 12
        %v847 = vpop.permute.xlu0 %846
        %848 = vrot.lane.b32.xlu0 %v411, 12
        %v849 = vpop.permute.xlu0 %848
        %850 = vrot.lane.b32.xlu0 %v413, 12
        %v851 = vpop.permute.xlu0 %850
        %852 = vrot.lane.b32.xlu0 %v416, 12
        %v853 = vpop.permute.xlu0 %852
        %854 = vrot.lane.b32.xlu0 %v418, 12
        %v855 = vpop.permute.xlu0 %854
        %856 = vrot.lane.b32.xlu0 %v793, 12
        %v857 = vpop.permute.xlu0 %856
        %858 = vrot.lane.b32.xlu0 %v795, 12
        %v859 = vpop.permute.xlu0 %858
        %v892 = vrot.slane %v284, 2
        %v893 = vrot.slane %v285, 2
        %v894 = vsel %vm515, %v892, %v893
        %v895 = vrot.slane %v286, 2
        %v896 = vsel %vm515, %v893, %v895
        %897 = vrot.lane.b32.xlu0 %v523, 15
        %v898 = vpop.permute.xlu0 %897
        %899 = vrot.lane.b32.xlu0 %v525, 15
        %v900 = vpop.permute.xlu0 %899
        %901 = vrot.lane.b32.xlu0 %v528, 15
        %v902 = vpop.permute.xlu0 %901
        %903 = vrot.lane.b32.xlu0 %v530, 15
        %v904 = vpop.permute.xlu0 %903
        %905 = vrot.lane.b32.xlu0 %v533, 15
        %v906 = vpop.permute.xlu0 %905
        %907 = vrot.lane.b32.xlu0 %v535, 15
        %v908 = vpop.permute.xlu0 %907
        %909 = vrot.lane.b32.xlu0 %v538, 15
        %v910 = vpop.permute.xlu0 %909
        %911 = vrot.lane.b32.xlu0 %v540, 15
        %v912 = vpop.permute.xlu0 %911
        %913 = vrot.lane.b32.xlu0 %v543, 15
        %v914 = vpop.permute.xlu0 %913
        %915 = vrot.lane.b32.xlu0 %v545, 15
        %v916 = vpop.permute.xlu0 %915
        %917 = vrot.lane.b32.xlu0 %v548, 15
        %v918 = vpop.permute.xlu0 %917
        %919 = vrot.lane.b32.xlu0 %v550, 15
        %v920 = vpop.permute.xlu0 %919
        %921 = vrot.lane.b32.xlu0 %v553, 15
        %v922 = vpop.permute.xlu0 %921
        %923 = vrot.lane.b32.xlu0 %v555, 15
        %v924 = vpop.permute.xlu0 %923
        %925 = vrot.lane.b32.xlu0 %v558, 15
        %v926 = vpop.permute.xlu0 %925
        %927 = vrot.lane.b32.xlu0 %v560, 15
        %v928 = vpop.permute.xlu0 %927
        %929 = vrot.lane.b32.xlu0 %v563, 15
        %v930 = vpop.permute.xlu0 %929
        %931 = vrot.lane.b32.xlu0 %v565, 15
        %v932 = vpop.permute.xlu0 %931
        %933 = vrot.lane.b32.xlu0 %v568, 15
        %v934 = vpop.permute.xlu0 %933
        %935 = vrot.lane.b32.xlu0 %v570, 15
        %v936 = vpop.permute.xlu0 %935
        %937 = vrot.lane.b32.xlu0 %v573, 15
        %v938 = vpop.permute.xlu0 %937
        %939 = vrot.lane.b32.xlu0 %v575, 15
        %v940 = vpop.permute.xlu0 %939
        %941 = vrot.lane.b32.xlu0 %v578, 15
        %v942 = vpop.permute.xlu0 %941
        %943 = vrot.lane.b32.xlu0 %v580, 15
        %v944 = vpop.permute.xlu0 %943
        %945 = vrot.lane.b32.xlu0 %v583, 15
        %v946 = vpop.permute.xlu0 %945
        %947 = vrot.lane.b32.xlu0 %v585, 15
        %v948 = vpop.permute.xlu0 %947
        %949 = vrot.lane.b32.xlu0 %v588, 15
        %v950 = vpop.permute.xlu0 %949
        %951 = vrot.lane.b32.xlu0 %v590, 15
        %v952 = vpop.permute.xlu0 %951
        %953 = vrot.lane.b32.xlu0 %v593, 15
        %v954 = vpop.permute.xlu0 %953
        %955 = vrot.lane.b32.xlu0 %v595, 15
        %v956 = vpop.permute.xlu0 %955
        %957 = vrot.lane.b32.xlu0 %v894, 15
        %v958 = vpop.permute.xlu0 %957
        %959 = vrot.lane.b32.xlu0 %v896, 15
        %v960 = vpop.permute.xlu0 %959
        %995 = vrot.lane.b32.xlu0 %v242, 18
        %v996 = vpop.permute.xlu0 %995
        %997 = vrot.lane.b32.xlu0 %v243, 18
        %v998 = vpop.permute.xlu0 %997
        %999 = vrot.lane.b32.xlu0 %v245, 18
        %v1000 = vpop.permute.xlu0 %999
        %1001 = vrot.lane.b32.xlu0 %v246, 18
        %v1002 = vpop.permute.xlu0 %1001
        %1003 = vrot.lane.b32.xlu0 %v248, 18
        %v1004 = vpop.permute.xlu0 %1003
        %1005 = vrot.lane.b32.xlu0 %v249, 18
        %v1006 = vpop.permute.xlu0 %1005
        %1007 = vrot.lane.b32.xlu0 %v251, 18
        %v1008 = vpop.permute.xlu0 %1007
        %1009 = vrot.lane.b32.xlu0 %v252, 18
        %v1010 = vpop.permute.xlu0 %1009
        %1011 = vrot.lane.b32.xlu0 %v254, 18
        %v1012 = vpop.permute.xlu0 %1011
        %1013 = vrot.lane.b32.xlu0 %v255, 18
        %v1014 = vpop.permute.xlu0 %1013
        %1015 = vrot.lane.b32.xlu0 %v257, 18
        %v1016 = vpop.permute.xlu0 %1015
        %1017 = vrot.lane.b32.xlu0 %v258, 18
        %v1018 = vpop.permute.xlu0 %1017
        %1019 = vrot.lane.b32.xlu0 %v260, 18
        %v1020 = vpop.permute.xlu0 %1019
        %1021 = vrot.lane.b32.xlu0 %v261, 18
        %v1022 = vpop.permute.xlu0 %1021
        %1023 = vrot.lane.b32.xlu0 %v263, 18
        %v1024 = vpop.permute.xlu0 %1023
        %1025 = vrot.lane.b32.xlu0 %v264, 18
        %v1026 = vpop.permute.xlu0 %1025
        %1027 = vrot.lane.b32.xlu0 %v266, 18
        %v1028 = vpop.permute.xlu0 %1027
        %1029 = vrot.lane.b32.xlu0 %v267, 18
        %v1030 = vpop.permute.xlu0 %1029
        %1031 = vrot.lane.b32.xlu0 %v269, 18
        %v1032 = vpop.permute.xlu0 %1031
        %1033 = vrot.lane.b32.xlu0 %v270, 18
        %v1034 = vpop.permute.xlu0 %1033
        %1035 = vrot.lane.b32.xlu0 %v272, 18
        %v1036 = vpop.permute.xlu0 %1035
        %1037 = vrot.lane.b32.xlu0 %v273, 18
        %v1038 = vpop.permute.xlu0 %1037
        %1039 = vrot.lane.b32.xlu0 %v275, 18
        %v1040 = vpop.permute.xlu0 %1039
        %1041 = vrot.lane.b32.xlu0 %v276, 18
        %v1042 = vpop.permute.xlu0 %1041
        %1043 = vrot.lane.b32.xlu0 %v278, 18
        %v1044 = vpop.permute.xlu0 %1043
        %1045 = vrot.lane.b32.xlu0 %v279, 18
        %v1046 = vpop.permute.xlu0 %1045
        %1047 = vrot.lane.b32.xlu0 %v281, 18
        %v1048 = vpop.permute.xlu0 %1047
        %1049 = vrot.lane.b32.xlu0 %v282, 18
        %v1050 = vpop.permute.xlu0 %1049
        %1051 = vrot.lane.b32.xlu0 %v284, 18
        %v1052 = vpop.permute.xlu0 %1051
        %1053 = vrot.lane.b32.xlu0 %v285, 18
        %v1054 = vpop.permute.xlu0 %1053
        %1055 = vrot.lane.b32.xlu0 %v287, 18
        %v1056 = vpop.permute.xlu0 %1055
        %1057 = vrot.lane.b32.xlu0 %v288, 18
        %v1058 = vpop.permute.xlu0 %1057
        %v1092 = vrot.slane %v287, 1
        %v1093 = vrot.slane %v288, 1
        %v1094 = vsel %vm338, %v1092, %v1093
        %v1095 = vrot.slane %v289, 1
        %v1096 = vsel %vm338, %v1093, %v1095
        %1097 = vrot.lane.b32.xlu0 %v351, 21
        %v1098 = vpop.permute.xlu0 %1097
        %1099 = vrot.lane.b32.xlu0 %v353, 21
        %v1100 = vpop.permute.xlu0 %1099
        %1101 = vrot.lane.b32.xlu0 %v356, 21
        %v1102 = vpop.permute.xlu0 %1101
        %1103 = vrot.lane.b32.xlu0 %v358, 21
        %v1104 = vpop.permute.xlu0 %1103
        %1105 = vrot.lane.b32.xlu0 %v361, 21
        %v1106 = vpop.permute.xlu0 %1105
        %1107 = vrot.lane.b32.xlu0 %v363, 21
        %v1108 = vpop.permute.xlu0 %1107
        %1109 = vrot.lane.b32.xlu0 %v366, 21
        %v1110 = vpop.permute.xlu0 %1109
        %1111 = vrot.lane.b32.xlu0 %v368, 21
        %v1112 = vpop.permute.xlu0 %1111
        %1113 = vrot.lane.b32.xlu0 %v371, 21
        %v1114 = vpop.permute.xlu0 %1113
        %1115 = vrot.lane.b32.xlu0 %v373, 21
        %v1116 = vpop.permute.xlu0 %1115
        %1117 = vrot.lane.b32.xlu0 %v376, 21
        %v1118 = vpop.permute.xlu0 %1117
        %1119 = vrot.lane.b32.xlu0 %v378, 21
        %v1120 = vpop.permute.xlu0 %1119
        %1121 = vrot.lane.b32.xlu0 %v381, 21
        %v1122 = vpop.permute.xlu0 %1121
        %1123 = vrot.lane.b32.xlu0 %v383, 21
        %v1124 = vpop.permute.xlu0 %1123
        %1125 = vrot.lane.b32.xlu0 %v386, 21
        %v1126 = vpop.permute.xlu0 %1125
        %1127 = vrot.lane.b32.xlu0 %v388, 21
        %v1128 = vpop.permute.xlu0 %1127
        %1129 = vrot.lane.b32.xlu0 %v391, 21
        %v1130 = vpop.permute.xlu0 %1129
        %1131 = vrot.lane.b32.xlu0 %v393, 21
        %v1132 = vpop.permute.xlu0 %1131
        %1133 = vrot.lane.b32.xlu0 %v396, 21
        %v1134 = vpop.permute.xlu0 %1133
        %1135 = vrot.lane.b32.xlu0 %v398, 21
        %v1136 = vpop.permute.xlu0 %1135
        %1137 = vrot.lane.b32.xlu0 %v401, 21
        %v1138 = vpop.permute.xlu0 %1137
        %1139 = vrot.lane.b32.xlu0 %v403, 21
        %v1140 = vpop.permute.xlu0 %1139
        %1141 = vrot.lane.b32.xlu0 %v406, 21
        %v1142 = vpop.permute.xlu0 %1141
        %1143 = vrot.lane.b32.xlu0 %v408, 21
        %v1144 = vpop.permute.xlu0 %1143
        %1145 = vrot.lane.b32.xlu0 %v411, 21
        %v1146 = vpop.permute.xlu0 %1145
        %1147 = vrot.lane.b32.xlu0 %v413, 21
        %v1148 = vpop.permute.xlu0 %1147
        %1149 = vrot.lane.b32.xlu0 %v416, 21
        %v1150 = vpop.permute.xlu0 %1149
        %1151 = vrot.lane.b32.xlu0 %v418, 21
        %v1152 = vpop.permute.xlu0 %1151
        %1153 = vrot.lane.b32.xlu0 %v793, 21
        %v1154 = vpop.permute.xlu0 %1153
        %1155 = vrot.lane.b32.xlu0 %v795, 21
        %v1156 = vpop.permute.xlu0 %1155
        %1157 = vrot.lane.b32.xlu0 %v1094, 21
        %v1158 = vpop.permute.xlu0 %1157
        %1159 = vrot.lane.b32.xlu0 %v1096, 21
        %v1160 = vpop.permute.xlu0 %1159
        %v1193 = vrot.slane %v287, 2
        %v1194 = vrot.slane %v288, 2
        %v1195 = vsel %vm515, %v1193, %v1194
        %v1196 = vrot.slane %v289, 2
        %v1197 = vsel %vm515, %v1194, %v1196
        %1198 = vrot.lane.b32.xlu0 %v528, 24
        %v1199 = vpop.permute.xlu0 %1198
        %1200 = vrot.lane.b32.xlu0 %v530, 24
        %v1201 = vpop.permute.xlu0 %1200
        %1202 = vrot.lane.b32.xlu0 %v533, 24
        %v1203 = vpop.permute.xlu0 %1202
        %1204 = vrot.lane.b32.xlu0 %v535, 24
        %v1205 = vpop.permute.xlu0 %1204
        %1206 = vrot.lane.b32.xlu0 %v538, 24
        %v1207 = vpop.permute.xlu0 %1206
        %1208 = vrot.lane.b32.xlu0 %v540, 24
        %v1209 = vpop.permute.xlu0 %1208
        %1210 = vrot.lane.b32.xlu0 %v543, 24
        %v1211 = vpop.permute.xlu0 %1210
        %1212 = vrot.lane.b32.xlu0 %v545, 24
        %v1213 = vpop.permute.xlu0 %1212
        %1214 = vrot.lane.b32.xlu0 %v548, 24
        %v1215 = vpop.permute.xlu0 %1214
        %1216 = vrot.lane.b32.xlu0 %v550, 24
        %v1217 = vpop.permute.xlu0 %1216
        %1218 = vrot.lane.b32.xlu0 %v553, 24
        %v1219 = vpop.permute.xlu0 %1218
        %1220 = vrot.lane.b32.xlu0 %v555, 24
        %v1221 = vpop.permute.xlu0 %1220
        %1222 = vrot.lane.b32.xlu0 %v558, 24
        %v1223 = vpop.permute.xlu0 %1222
        %1224 = vrot.lane.b32.xlu0 %v560, 24
        %v1225 = vpop.permute.xlu0 %1224
        %1226 = vrot.lane.b32.xlu0 %v563, 24
        %v1227 = vpop.permute.xlu0 %1226
        %1228 = vrot.lane.b32.xlu0 %v565, 24
        %v1229 = vpop.permute.xlu0 %1228
        %1230 = vrot.lane.b32.xlu0 %v568, 24
        %v1231 = vpop.permute.xlu0 %1230
        %1232 = vrot.lane.b32.xlu0 %v570, 24
        %v1233 = vpop.permute.xlu0 %1232
        %1234 = vrot.lane.b32.xlu0 %v573, 24
        %v1235 = vpop.permute.xlu0 %1234
        %1236 = vrot.lane.b32.xlu0 %v575, 24
        %v1237 = vpop.permute.xlu0 %1236
        %1238 = vrot.lane.b32.xlu0 %v578, 24
        %v1239 = vpop.permute.xlu0 %1238
        %1240 = vrot.lane.b32.xlu0 %v580, 24
        %v1241 = vpop.permute.xlu0 %1240
        %1242 = vrot.lane.b32.xlu0 %v583, 24
        %v1243 = vpop.permute.xlu0 %1242
        %1244 = vrot.lane.b32.xlu0 %v585, 24
        %v1245 = vpop.permute.xlu0 %1244
        %1246 = vrot.lane.b32.xlu0 %v588, 24
        %v1247 = vpop.permute.xlu0 %1246
        %1248 = vrot.lane.b32.xlu0 %v590, 24
        %v1249 = vpop.permute.xlu0 %1248
        %1250 = vrot.lane.b32.xlu0 %v593, 24
        %v1251 = vpop.permute.xlu0 %1250
        %1252 = vrot.lane.b32.xlu0 %v595, 24
        %v1253 = vpop.permute.xlu0 %1252
        %1254 = vrot.lane.b32.xlu0 %v894, 24
        %v1255 = vpop.permute.xlu0 %1254
        %1256 = vrot.lane.b32.xlu0 %v896, 24
        %v1257 = vpop.permute.xlu0 %1256
        %1258 = vrot.lane.b32.xlu0 %v1195, 24
        %v1259 = vpop.permute.xlu0 %1258
        %1260 = vrot.lane.b32.xlu0 %v1197, 24
        %v1261 = vpop.permute.xlu0 %1260
        %vm1294 = vcmask 23552
        %v1295 = vsel %vm1294, %v236, %v420
        %v1296 = vsel %vm1294, %v237, %v422
        %v1297 = vsel %vm1294, %v239, %v424
        %v1298 = vsel %vm1294, %v240, %v426
        %v1299 = vsel %vm1294, %v242, %v428
        %v1300 = vsel %vm1294, %v243, %v430
        %v1301 = vsel %vm1294, %v245, %v432
        %v1302 = vsel %vm1294, %v246, %v434
        %v1303 = vsel %vm1294, %v248, %v436
        %v1304 = vsel %vm1294, %v249, %v438
        %v1305 = vsel %vm1294, %v251, %v440
        %v1306 = vsel %vm1294, %v252, %v442
        %v1307 = vsel %vm1294, %v254, %v444
        %v1308 = vsel %vm1294, %v255, %v446
        %v1309 = vsel %vm1294, %v257, %v448
        %v1310 = vsel %vm1294, %v258, %v450
        %v1311 = vsel %vm1294, %v260, %v452
        %v1312 = vsel %vm1294, %v261, %v454
        %v1313 = vsel %vm1294, %v263, %v456
        %v1314 = vsel %vm1294, %v264, %v458
        %v1315 = vsel %vm1294, %v266, %v460
        %v1316 = vsel %vm1294, %v267, %v462
        %v1317 = vsel %vm1294, %v269, %v464
        %v1318 = vsel %vm1294, %v270, %v466
        %v1319 = vsel %vm1294, %v272, %v468
        %v1320 = vsel %vm1294, %v273, %v470
        %v1321 = vsel %vm1294, %v275, %v472
        %v1322 = vsel %vm1294, %v276, %v474
        %v1323 = vsel %vm1294, %v278, %v476
        %v1324 = vsel %vm1294, %v279, %v478
        %v1325 = vsel %vm1294, %v281, %v480
        %v1326 = vsel %vm1294, %v282, %v482
        %vm1327 = vcmask 48128
        %v1328 = vsel %vm1327, %v1295, %v597
        %v1329 = vsel %vm1327, %v1296, %v599
        %v1330 = vsel %vm1327, %v1297, %v601
        %v1331 = vsel %vm1327, %v1298, %v603
        %v1332 = vsel %vm1327, %v1299, %v605
        %v1333 = vsel %vm1327, %v1300, %v607
        %v1334 = vsel %vm1327, %v1301, %v609
        %v1335 = vsel %vm1327, %v1302, %v611
        %v1336 = vsel %vm1327, %v1303, %v613
        %v1337 = vsel %vm1327, %v1304, %v615
        %v1338 = vsel %vm1327, %v1305, %v617
        %v1339 = vsel %vm1327, %v1306, %v619
        %v1340 = vsel %vm1327, %v1307, %v621
        %v1341 = vsel %vm1327, %v1308, %v623
        %v1342 = vsel %vm1327, %v1309, %v625
        %v1343 = vsel %vm1327, %v1310, %v627
        %v1344 = vsel %vm1327, %v1311, %v629
        %v1345 = vsel %vm1327, %v1312, %v631
        %v1346 = vsel %vm1327, %v1313, %v633
        %v1347 = vsel %vm1327, %v1314, %v635
        %v1348 = vsel %vm1327, %v1315, %v637
        %v1349 = vsel %vm1327, %v1316, %v639
        %v1350 = vsel %vm1327, %v1317, %v641
        %v1351 = vsel %vm1327, %v1318, %v643
        %v1352 = vsel %vm1327, %v1319, %v645
        %v1353 = vsel %vm1327, %v1320, %v647
        %v1354 = vsel %vm1327, %v1321, %v649
        %v1355 = vsel %vm1327, %v1322, %v651
        %v1356 = vsel %vm1327, %v1323, %v653
        %v1357 = vsel %vm1327, %v1324, %v655
        %v1358 = vsel %vm1327, %v1325, %v657
        %v1359 = vsel %vm1327, %v1326, %v659
        %vm1360 = vcmask 72704
        %v1361 = vsel %vm1360, %v1328, %v695
        %v1362 = vsel %vm1360, %v1329, %v697
        %v1363 = vsel %vm1360, %v1330, %v699
        %v1364 = vsel %vm1360, %v1331, %v701
        %v1365 = vsel %vm1360, %v1332, %v703
        %v1366 = vsel %vm1360, %v1333, %v705
        %v1367 = vsel %vm1360, %v1334, %v707
        %v1368 = vsel %vm1360, %v1335, %v709
        %v1369 = vsel %vm1360, %v1336, %v711
        %v1370 = vsel %vm1360, %v1337, %v713
        %v1371 = vsel %vm1360, %v1338, %v715
        %v1372 = vsel %vm1360, %v1339, %v717
        %v1373 = vsel %vm1360, %v1340, %v719
        %v1374 = vsel %vm1360, %v1341, %v721
        %v1375 = vsel %vm1360, %v1342, %v723
        %v1376 = vsel %vm1360, %v1343, %v725
        %v1377 = vsel %vm1360, %v1344, %v727
        %v1378 = vsel %vm1360, %v1345, %v729
        %v1379 = vsel %vm1360, %v1346, %v731
        %v1380 = vsel %vm1360, %v1347, %v733
        %v1381 = vsel %vm1360, %v1348, %v735
        %v1382 = vsel %vm1360, %v1349, %v737
        %v1383 = vsel %vm1360, %v1350, %v739
        %v1384 = vsel %vm1360, %v1351, %v741
        %v1385 = vsel %vm1360, %v1352, %v743
        %v1386 = vsel %vm1360, %v1353, %v745
        %v1387 = vsel %vm1360, %v1354, %v747
        %v1388 = vsel %vm1360, %v1355, %v749
        %v1389 = vsel %vm1360, %v1356, %v751
        %v1390 = vsel %vm1360, %v1357, %v753
        %v1391 = vsel %vm1360, %v1358, %v755
        %v1392 = vsel %vm1360, %v1359, %v757
        %vm1393 = vcmask 97280
        %v1394 = vsel %vm1393, %v1361, %v797
        %v1395 = vsel %vm1393, %v1362, %v799
        %v1396 = vsel %vm1393, %v1363, %v801
        %v1397 = vsel %vm1393, %v1364, %v803
        %v1398 = vsel %vm1393, %v1365, %v805
        %v1399 = vsel %vm1393, %v1366, %v807
        %v1400 = vsel %vm1393, %v1367, %v809
        %v1401 = vsel %vm1393, %v1368, %v811
        %v1402 = vsel %vm1393, %v1369, %v813
        %v1403 = vsel %vm1393, %v1370, %v815
        %v1404 = vsel %vm1393, %v1371, %v817
        %v1405 = vsel %vm1393, %v1372, %v819
        %v1406 = vsel %vm1393, %v1373, %v821
        %v1407 = vsel %vm1393, %v1374, %v823
        %v1408 = vsel %vm1393, %v1375, %v825
        %v1409 = vsel %vm1393, %v1376, %v827
        %v1410 = vsel %vm1393, %v1377, %v829
        %v1411 = vsel %vm1393, %v1378, %v831
        %v1412 = vsel %vm1393, %v1379, %v833
        %v1413 = vsel %vm1393, %v1380, %v835
        %v1414 = vsel %vm1393, %v1381, %v837
        %v1415 = vsel %vm1393, %v1382, %v839
        %v1416 = vsel %vm1393, %v1383, %v841
        %v1417 = vsel %vm1393, %v1384, %v843
        %v1418 = vsel %vm1393, %v1385, %v845
        %v1419 = vsel %vm1393, %v1386, %v847
        %v1420 = vsel %vm1393, %v1387, %v849
        %v1421 = vsel %vm1393, %v1388, %v851
        %v1422 = vsel %vm1393, %v1389, %v853
        %v1423 = vsel %vm1393, %v1390, %v855
        %v1424 = vsel %vm1393, %v1391, %v857
        %v1425 = vsel %vm1393, %v1392, %v859
        %vm1426 = vcmask 121856
        %v1427 = vsel %vm1426, %v1394, %v898
        %v1428 = vsel %vm1426, %v1395, %v900
        %v1429 = vsel %vm1426, %v1396, %v902
        %v1430 = vsel %vm1426, %v1397, %v904
        %v1431 = vsel %vm1426, %v1398, %v906
        %v1432 = vsel %vm1426, %v1399, %v908
        %v1433 = vsel %vm1426, %v1400, %v910
        %v1434 = vsel %vm1426, %v1401, %v912
        %v1435 = vsel %vm1426, %v1402, %v914
        %v1436 = vsel %vm1426, %v1403, %v916
        %v1437 = vsel %vm1426, %v1404, %v918
        %v1438 = vsel %vm1426, %v1405, %v920
        %v1439 = vsel %vm1426, %v1406, %v922
        %v1440 = vsel %vm1426, %v1407, %v924
        %v1441 = vsel %vm1426, %v1408, %v926
        %v1442 = vsel %vm1426, %v1409, %v928
        %v1443 = vsel %vm1426, %v1410, %v930
        %v1444 = vsel %vm1426, %v1411, %v932
        %v1445 = vsel %vm1426, %v1412, %v934
        %v1446 = vsel %vm1426, %v1413, %v936
        %v1447 = vsel %vm1426, %v1414, %v938
        %v1448 = vsel %vm1426, %v1415, %v940
        %v1449 = vsel %vm1426, %v1416, %v942
        %v1450 = vsel %vm1426, %v1417, %v944
        %v1451 = vsel %vm1426, %v1418, %v946
        %v1452 = vsel %vm1426, %v1419, %v948
        %v1453 = vsel %vm1426, %v1420, %v950
        %v1454 = vsel %vm1426, %v1421, %v952
        %v1455 = vsel %vm1426, %v1422, %v954
        %v1456 = vsel %vm1426, %v1423, %v956
        %v1457 = vsel %vm1426, %v1424, %v958
        %v1458 = vsel %vm1426, %v1425, %v960
        %vm1459 = vcmask 146432
        %v1460 = vsel %vm1459, %v1427, %v996
        %v1461 = vsel %vm1459, %v1428, %v998
        %v1462 = vsel %vm1459, %v1429, %v1000
        %v1463 = vsel %vm1459, %v1430, %v1002
        %v1464 = vsel %vm1459, %v1431, %v1004
        %v1465 = vsel %vm1459, %v1432, %v1006
        %v1466 = vsel %vm1459, %v1433, %v1008
        %v1467 = vsel %vm1459, %v1434, %v1010
        %v1468 = vsel %vm1459, %v1435, %v1012
        %v1469 = vsel %vm1459, %v1436, %v1014
        %v1470 = vsel %vm1459, %v1437, %v1016
        %v1471 = vsel %vm1459, %v1438, %v1018
        %v1472 = vsel %vm1459, %v1439, %v1020
        %v1473 = vsel %vm1459, %v1440, %v1022
        %v1474 = vsel %vm1459, %v1441, %v1024
        %v1475 = vsel %vm1459, %v1442, %v1026
        %v1476 = vsel %vm1459, %v1443, %v1028
        %v1477 = vsel %vm1459, %v1444, %v1030
        %v1478 = vsel %vm1459, %v1445, %v1032
        %v1479 = vsel %vm1459, %v1446, %v1034
        %v1480 = vsel %vm1459, %v1447, %v1036
        %v1481 = vsel %vm1459, %v1448, %v1038
        %v1482 = vsel %vm1459, %v1449, %v1040
        %v1483 = vsel %vm1459, %v1450, %v1042
        %v1484 = vsel %vm1459, %v1451, %v1044
        %v1485 = vsel %vm1459, %v1452, %v1046
        %v1486 = vsel %vm1459, %v1453, %v1048
        %v1487 = vsel %vm1459, %v1454, %v1050
        %v1488 = vsel %vm1459, %v1455, %v1052
        %v1489 = vsel %vm1459, %v1456, %v1054
        %v1490 = vsel %vm1459, %v1457, %v1056
        %v1491 = vsel %vm1459, %v1458, %v1058
        %vm1492 = vcmask 171008
        %v1493 = vsel %vm1492, %v1460, %v1098
        %v1494 = vsel %vm1492, %v1461, %v1100
        %v1495 = vsel %vm1492, %v1462, %v1102
        %v1496 = vsel %vm1492, %v1463, %v1104
        %v1497 = vsel %vm1492, %v1464, %v1106
        %v1498 = vsel %vm1492, %v1465, %v1108
        %v1499 = vsel %vm1492, %v1466, %v1110
        %v1500 = vsel %vm1492, %v1467, %v1112
        %v1501 = vsel %vm1492, %v1468, %v1114
        %v1502 = vsel %vm1492, %v1469, %v1116
        %v1503 = vsel %vm1492, %v1470, %v1118
        %v1504 = vsel %vm1492, %v1471, %v1120
        %v1505 = vsel %vm1492, %v1472, %v1122
        %v1506 = vsel %vm1492, %v1473, %v1124
        %v1507 = vsel %vm1492, %v1474, %v1126
        %v1508 = vsel %vm1492, %v1475, %v1128
        %v1509 = vsel %vm1492, %v1476, %v1130
        %v1510 = vsel %vm1492, %v1477, %v1132
        %v1511 = vsel %vm1492, %v1478, %v1134
        %v1512 = vsel %vm1492, %v1479, %v1136
        %v1513 = vsel %vm1492, %v1480, %v1138
        %v1514 = vsel %vm1492, %v1481, %v1140
        %v1515 = vsel %vm1492, %v1482, %v1142
        %v1516 = vsel %vm1492, %v1483, %v1144
        %v1517 = vsel %vm1492, %v1484, %v1146
        %v1518 = vsel %vm1492, %v1485, %v1148
        %v1519 = vsel %vm1492, %v1486, %v1150
        %v1520 = vsel %vm1492, %v1487, %v1152
        %v1521 = vsel %vm1492, %v1488, %v1154
        %v1522 = vsel %vm1492, %v1489, %v1156
        %v1523 = vsel %vm1492, %v1490, %v1158
        %v1524 = vsel %vm1492, %v1491, %v1160
        %vm1525 = vcmask 195584
        %v1526 = vsel %vm1525, %v1493, %v1199
        %v1527 = vsel %vm1525, %v1494, %v1201
        %v1528 = vsel %vm1525, %v1495, %v1203
        %v1529 = vsel %vm1525, %v1496, %v1205
        %v1530 = vsel %vm1525, %v1497, %v1207
        %v1531 = vsel %vm1525, %v1498, %v1209
        %v1532 = vsel %vm1525, %v1499, %v1211
        %v1533 = vsel %vm1525, %v1500, %v1213
        %v1534 = vsel %vm1525, %v1501, %v1215
        %v1535 = vsel %vm1525, %v1502, %v1217
        %v1536 = vsel %vm1525, %v1503, %v1219
        %v1537 = vsel %vm1525, %v1504, %v1221
        %v1538 = vsel %vm1525, %v1505, %v1223
        %v1539 = vsel %vm1525, %v1506, %v1225
        %v1540 = vsel %vm1525, %v1507, %v1227
        %v1541 = vsel %vm1525, %v1508, %v1229
        %v1542 = vsel %vm1525, %v1509, %v1231
        %v1543 = vsel %vm1525, %v1510, %v1233
        %v1544 = vsel %vm1525, %v1511, %v1235
        %v1545 = vsel %vm1525, %v1512, %v1237
        %v1546 = vsel %vm1525, %v1513, %v1239
        %v1547 = vsel %vm1525, %v1514, %v1241
        %v1548 = vsel %vm1525, %v1515, %v1243
        %v1549 = vsel %vm1525, %v1516, %v1245
        %v1550 = vsel %vm1525, %v1517, %v1247
        %v1551 = vsel %vm1525, %v1518, %v1249
        %v1552 = vsel %vm1525, %v1519, %v1251
        %v1553 = vsel %vm1525, %v1520, %v1253
        %v1554 = vsel %vm1525, %v1521, %v1255
        %v1555 = vsel %vm1525, %v1522, %v1257
        %v1556 = vsel %vm1525, %v1523, %v1259
        %v1557 = vsel %vm1525, %v1524, %v1261
        %v1558 = vld [vmem:[%s1] sm:$0xff]
        %v1559 = vld [vmem:[%s1 + $0x8] sm:$0x1]
        %v1560 = vld [vmem:[%s1 + $0x10] sm:$0xff]
        %v1561 = vld [vmem:[%s1 + $0x18] sm:$0x1]
        %v1562 = vld [vmem:[%s1 + $0x20] sm:$0xff]
        %v1563 = vld [vmem:[%s1 + $0x28] sm:$0x1]
        %v1570 = vcombine.high %v1558, %v1558
        %v1572 = vunpack.c.l.s4 1966171168
        %v1573 = vunpack.c.0.s8 %v1572
        %v1574 = vlaneseq
        %v1575 = vshrl.u32 %v1574, 7
        %v1576 = vsub.s32 %v1573, %v1575
        %v1577 = vrot.slane %v1558, %v1576
        %v1579 = vunpack.c.l.s4 1966171168
        %v1580 = vunpack.c.0.s8 %v1579
        %v1581 = vlaneseq
        %v1582 = vshrl.u32 %v1581, 7
        %v1583 = vsub.s32 %v1580, %v1582
        %v1584 = vrot.slane %v1570, %v1583
        %v1585 = vcombine.high %v1577, %v1577
        %v1586 = vcombine.high %v1584, %v1584
        %v1588 = vunpack.c.l.s4 1966171168
        %v1589 = vunpack.c.0.s8 %v1588
        %v1590 = vlaneseq
        %v1591 = vshrl.u32 %v1590, 7
        %v1592 = vsub.s32 %v1589, %v1591
        %v1593 = vrot.slane %v1577, %v1592
        %v1595 = vunpack.c.l.s4 1966171168
        %v1596 = vunpack.c.0.s8 %v1595
        %v1597 = vlaneseq
        %v1598 = vshrl.u32 %v1597, 7
        %v1599 = vsub.s32 %v1596, %v1598
        %v1600 = vrot.slane %v1584, %v1599
        %v1602 = vunpack.c.l.s4 1966171168
        %v1603 = vunpack.c.0.s8 %v1602
        %v1604 = vlaneseq
        %v1605 = vshrl.u32 %v1604, 7
        %v1606 = vsub.s32 %v1603, %v1605
        %v1607 = vrot.slane %v1585, %v1606
        %v1609 = vunpack.c.l.s4 1966171168
        %v1610 = vunpack.c.0.s8 %v1609
        %v1611 = vlaneseq
        %v1612 = vshrl.u32 %v1611, 7
        %v1613 = vsub.s32 %v1610, %v1612
        %v1614 = vrot.slane %v1586, %v1613
        %v1615 = vcombine.high %v1593, %v1593
        %v1616 = vcombine.high %v1600, %v1600
        %v1617 = vcombine.high %v1607, %v1607
        %v1618 = vcombine.high %v1614, %v1614
        %v1620 = vunpack.c.l.s4 1966171168
        %v1621 = vunpack.c.0.s8 %v1620
        %v1622 = vlaneseq
        %v1623 = vshrl.u32 %v1622, 7
        %v1624 = vsub.s32 %v1621, %v1623
        %v1625 = vrot.slane %v1559, %v1624
        %v1627 = vunpack.c.l.s4 1966171168
        %v1628 = vunpack.c.0.s8 %v1627
        %v1629 = vlaneseq
        %v1630 = vshrl.u32 %v1629, 7
        %v1631 = vsub.s32 %v1628, %v1630
        %v1632 = vrot.slane %v1625, %v1631
        %v1633 = vcombine.high %v1560, %v1560
        %v1635 = vunpack.c.l.s4 1966171168
        %v1636 = vunpack.c.0.s8 %v1635
        %v1637 = vlaneseq
        %v1638 = vshrl.u32 %v1637, 7
        %v1639 = vsub.s32 %v1636, %v1638
        %v1640 = vrot.slane %v1560, %v1639
        %v1642 = vunpack.c.l.s4 1966171168
        %v1643 = vunpack.c.0.s8 %v1642
        %v1644 = vlaneseq
        %v1645 = vshrl.u32 %v1644, 7
        %v1646 = vsub.s32 %v1643, %v1645
        %v1647 = vrot.slane %v1633, %v1646
        %v1648 = vcombine.high %v1640, %v1640
        %v1649 = vcombine.high %v1647, %v1647
        %v1651 = vunpack.c.l.s4 1966171168
        %v1652 = vunpack.c.0.s8 %v1651
        %v1653 = vlaneseq
        %v1654 = vshrl.u32 %v1653, 7
        %v1655 = vsub.s32 %v1652, %v1654
        %v1656 = vrot.slane %v1640, %v1655
        %v1658 = vunpack.c.l.s4 1966171168
        %v1659 = vunpack.c.0.s8 %v1658
        %v1660 = vlaneseq
        %v1661 = vshrl.u32 %v1660, 7
        %v1662 = vsub.s32 %v1659, %v1661
        %v1663 = vrot.slane %v1647, %v1662
        %v1665 = vunpack.c.l.s4 1966171168
        %v1666 = vunpack.c.0.s8 %v1665
        %v1667 = vlaneseq
        %v1668 = vshrl.u32 %v1667, 7
        %v1669 = vsub.s32 %v1666, %v1668
        %v1670 = vrot.slane %v1648, %v1669
        %v1672 = vunpack.c.l.s4 1966171168
        %v1673 = vunpack.c.0.s8 %v1672
        %v1674 = vlaneseq
        %v1675 = vshrl.u32 %v1674, 7
        %v1676 = vsub.s32 %v1673, %v1675
        %v1677 = vrot.slane %v1649, %v1676
        %v1678 = vcombine.high %v1656, %v1656
        %v1679 = vcombine.high %v1663, %v1663
        %v1680 = vcombine.high %v1670, %v1670
        %v1681 = vcombine.high %v1677, %v1677
        %v1683 = vunpack.c.l.s4 1966171168
        %v1684 = vunpack.c.0.s8 %v1683
        %v1685 = vlaneseq
        %v1686 = vshrl.u32 %v1685, 7
        %v1687 = vsub.s32 %v1684, %v1686
        %v1688 = vrot.slane %v1561, %v1687
        %v1690 = vunpack.c.l.s4 1966171168
        %v1691 = vunpack.c.0.s8 %v1690
        %v1692 = vlaneseq
        %v1693 = vshrl.u32 %v1692, 7
        %v1694 = vsub.s32 %v1691, %v1693
        %v1695 = vrot.slane %v1688, %v1694
        %v1696 = vcombine.high %v1562, %v1562
        %v1698 = vunpack.c.l.s4 1966171168
        %v1699 = vunpack.c.0.s8 %v1698
        %v1700 = vlaneseq
        %v1701 = vshrl.u32 %v1700, 7
        %v1702 = vsub.s32 %v1699, %v1701
        %v1703 = vrot.slane %v1562, %v1702
        %v1705 = vunpack.c.l.s4 1966171168
        %v1706 = vunpack.c.0.s8 %v1705
        %v1707 = vlaneseq
        %v1708 = vshrl.u32 %v1707, 7
        %v1709 = vsub.s32 %v1706, %v1708
        %v1710 = vrot.slane %v1696, %v1709
        %v1711 = vcombine.high %v1703, %v1703
        %v1712 = vcombine.high %v1710, %v1710
        %v1714 = vunpack.c.l.s4 1966171168
        %v1715 = vunpack.c.0.s8 %v1714
        %v1716 = vlaneseq
        %v1717 = vshrl.u32 %v1716, 7
        %v1718 = vsub.s32 %v1715, %v1717
        %v1719 = vrot.slane %v1703, %v1718
        %v1721 = vunpack.c.l.s4 1966171168
        %v1722 = vunpack.c.0.s8 %v1721
        %v1723 = vlaneseq
        %v1724 = vshrl.u32 %v1723, 7
        %v1725 = vsub.s32 %v1722, %v1724
        %v1726 = vrot.slane %v1710, %v1725
        %v1728 = vunpack.c.l.s4 1966171168
        %v1729 = vunpack.c.0.s8 %v1728
        %v1730 = vlaneseq
        %v1731 = vshrl.u32 %v1730, 7
        %v1732 = vsub.s32 %v1729, %v1731
        %v1733 = vrot.slane %v1711, %v1732
        %v1735 = vunpack.c.l.s4 1966171168
        %v1736 = vunpack.c.0.s8 %v1735
        %v1737 = vlaneseq
        %v1738 = vshrl.u32 %v1737, 7
        %v1739 = vsub.s32 %v1736, %v1738
        %v1740 = vrot.slane %v1712, %v1739
        %v1741 = vcombine.high %v1719, %v1719
        %v1742 = vcombine.high %v1726, %v1726
        %v1743 = vcombine.high %v1733, %v1733
        %v1744 = vcombine.high %v1740, %v1740
        %v1746 = vunpack.c.l.s4 1966171168
        %v1747 = vunpack.c.0.s8 %v1746
        %v1748 = vlaneseq
        %v1749 = vshrl.u32 %v1748, 7
        %v1750 = vsub.s32 %v1747, %v1749
        %v1751 = vrot.slane %v1563, %v1750
        %v1753 = vunpack.c.l.s4 1966171168
        %v1754 = vunpack.c.0.s8 %v1753
        %v1755 = vlaneseq
        %v1756 = vshrl.u32 %v1755, 7
        %v1757 = vsub.s32 %v1754, %v1756
        %v1758 = vrot.slane %v1751, %v1757
        %v1759 = vcombine.low %v1593, %v1607
        %v1760 = vcombine.low %v1615, %v1617
        %v1761 = vcombine.low %v1600, %v1614
        %v1762 = vcombine.low %v1616, %v1618
        %v1764 = vunpack.c.l.s4 1966171168
        %v1765 = vunpack.c.0.s8 %v1764
        %v1766 = vlaneseq
        %v1767 = vshrl.u32 %v1766, 7
        %v1768 = vsub.s32 %v1765, %v1767
        %v1769 = vrot.slane %v1759, %v1768
        %v1771 = vunpack.c.l.s4 1966171168
        %v1772 = vunpack.c.0.s8 %v1771
        %v1773 = vlaneseq
        %v1774 = vshrl.u32 %v1773, 7
        %v1775 = vsub.s32 %v1772, %v1774
        %v1776 = vrot.slane %v1760, %v1775
        %v1778 = vunpack.c.l.s4 1966171168
        %v1779 = vunpack.c.0.s8 %v1778
        %v1780 = vlaneseq
        %v1781 = vshrl.u32 %v1780, 7
        %v1782 = vsub.s32 %v1779, %v1781
        %v1783 = vrot.slane %v1761, %v1782
        %v1785 = vunpack.c.l.s4 1966171168
        %v1786 = vunpack.c.0.s8 %v1785
        %v1787 = vlaneseq
        %v1788 = vshrl.u32 %v1787, 7
        %v1789 = vsub.s32 %v1786, %v1788
        %v1790 = vrot.slane %v1762, %v1789
        %v1791 = vcombine.low %v1769, %v1776
        %v1792 = vcombine.low %v1783, %v1790
        %v1794 = vunpack.c.l.s4 1966171168
        %v1795 = vunpack.c.0.s8 %v1794
        %v1796 = vlaneseq
        %v1797 = vshrl.u32 %v1796, 7
        %v1798 = vsub.s32 %v1795, %v1797
        %v1799 = vrot.slane %v1791, %v1798
        %v1801 = vunpack.c.l.s4 1966171168
        %v1802 = vunpack.c.0.s8 %v1801
        %v1803 = vlaneseq
        %v1804 = vshrl.u32 %v1803, 7
        %v1805 = vsub.s32 %v1802, %v1804
        %v1806 = vrot.slane %v1792, %v1805
        %v1807 = vcombine.low %v1799, %v1806
        %v1808 = vcombine.low %v1632, %v1656
        %v1809 = vcombine.low %v1670, %v1678
        %v1810 = vcombine.low %v1680, %v1663
        %v1811 = vcombine.low %v1677, %v1679
        %v1813 = vunpack.c.l.s4 1966171168
        %v1814 = vunpack.c.0.s8 %v1813
        %v1815 = vlaneseq
        %v1816 = vshrl.u32 %v1815, 7
        %v1817 = vsub.s32 %v1814, %v1816
        %v1818 = vrot.slane %v1808, %v1817
        %v1820 = vunpack.c.l.s4 1966171168
        %v1821 = vunpack.c.0.s8 %v1820
        %v1822 = vlaneseq
        %v1823 = vshrl.u32 %v1822, 7
        %v1824 = vsub.s32 %v1821, %v1823
        %v1825 = vrot.slane %v1809, %v1824
        %v1827 = vunpack.c.l.s4 1966171168
        %v1828 = vunpack.c.0.s8 %v1827
        %v1829 = vlaneseq
        %v1830 = vshrl.u32 %v1829, 7
        %v1831 = vsub.s32 %v1828, %v1830
        %v1832 = vrot.slane %v1810, %v1831
        %v1834 = vunpack.c.l.s4 1966171168
        %v1835 = vunpack.c.0.s8 %v1834
        %v1836 = vlaneseq
        %v1837 = vshrl.u32 %v1836, 7
        %v1838 = vsub.s32 %v1835, %v1837
        %v1839 = vrot.slane %v1811, %v1838
        %v1840 = vcombine.low %v1818, %v1825
        %v1841 = vcombine.low %v1832, %v1839
        %v1843 = vunpack.c.l.s4 1966171168
        %v1844 = vunpack.c.0.s8 %v1843
        %v1845 = vlaneseq
        %v1846 = vshrl.u32 %v1845, 7
        %v1847 = vsub.s32 %v1844, %v1846
        %v1848 = vrot.slane %v1840, %v1847
        %v1850 = vunpack.c.l.s4 1966171168
        %v1851 = vunpack.c.0.s8 %v1850
        %v1852 = vlaneseq
        %v1853 = vshrl.u32 %v1852, 7
        %v1854 = vsub.s32 %v1851, %v1853
        %v1855 = vrot.slane %v1841, %v1854
        %v1856 = vcombine.low %v1848, %v1855
        %v1857 = vcombine.low %v1681, %v1695
        %v1858 = vcombine.low %v1719, %v1733
        %v1859 = vcombine.low %v1741, %v1743
        %v1860 = vcombine.low %v1726, %v1740
        %v1862 = vunpack.c.l.s4 1966171168
        %v1863 = vunpack.c.0.s8 %v1862
        %v1864 = vlaneseq
        %v1865 = vshrl.u32 %v1864, 7
        %v1866 = vsub.s32 %v1863, %v1865
        %v1867 = vrot.slane %v1857, %v1866
        %v1869 = vunpack.c.l.s4 1966171168
        %v1870 = vunpack.c.0.s8 %v1869
        %v1871 = vlaneseq
        %v1872 = vshrl.u32 %v1871, 7
        %v1873 = vsub.s32 %v1870, %v1872
        %v1874 = vrot.slane %v1858, %v1873
        %v1876 = vunpack.c.l.s4 1966171168
        %v1877 = vunpack.c.0.s8 %v1876
        %v1878 = vlaneseq
        %v1879 = vshrl.u32 %v1878, 7
        %v1880 = vsub.s32 %v1877, %v1879
        %v1881 = vrot.slane %v1859, %v1880
        %v1883 = vunpack.c.l.s4 1966171168
        %v1884 = vunpack.c.0.s8 %v1883
        %v1885 = vlaneseq
        %v1886 = vshrl.u32 %v1885, 7
        %v1887 = vsub.s32 %v1884, %v1886
        %v1888 = vrot.slane %v1860, %v1887
        %v1889 = vcombine.low %v1867, %v1874
        %v1890 = vcombine.low %v1881, %v1888
        %v1892 = vunpack.c.l.s4 1966171168
        %v1893 = vunpack.c.0.s8 %v1892
        %v1894 = vlaneseq
        %v1895 = vshrl.u32 %v1894, 7
        %v1896 = vsub.s32 %v1893, %v1895
        %v1897 = vrot.slane %v1889, %v1896
        %v1899 = vunpack.c.l.s4 1966171168
        %v1900 = vunpack.c.0.s8 %v1899
        %v1901 = vlaneseq
        %v1902 = vshrl.u32 %v1901, 7
        %v1903 = vsub.s32 %v1900, %v1902
        %v1904 = vrot.slane %v1890, %v1903
        %v1905 = vcombine.low %v1897, %v1904
        %v1906 = vcombine.low %v1742, %v1744
        %v1908 = vunpack.c.l.s4 1966171168
        %v1909 = vunpack.c.0.s8 %v1908
        %v1910 = vlaneseq
        %v1911 = vshrl.u32 %v1910, 7
        %v1912 = vsub.s32 %v1909, %v1911
        %v1913 = vrot.slane %v1906, %v1912
        %v1915 = vunpack.c.l.s4 1966171168
        %v1916 = vunpack.c.0.s8 %v1915
        %v1917 = vlaneseq
        %v1918 = vshrl.u32 %v1917, 7
        %v1919 = vsub.s32 %v1916, %v1918
        %v1920 = vrot.slane %v1758, %v1919
        %v1921 = vcombine.low %v1913, %v1920
        %v1923 = vunpack.c.l.s4 1966171168
        %v1924 = vunpack.c.0.s8 %v1923
        %v1925 = vlaneseq
        %v1926 = vshrl.u32 %v1925, 7
        %v1927 = vsub.s32 %v1924, %v1926
        %v1928 = vrot.slane %v1921, %v1927
        %vm1932 = vcmask 220160
        %v1934 = vsel %vm1932, %v1526, 0
        %v1937 = vsel %vm1932, %v1527, 0
        %v1940 = vsel %vm1932, %v1528, 0
        %v1943 = vsel %vm1932, %v1529, 0
        %v1946 = vsel %vm1932, %v1530, 0
        %v1949 = vsel %vm1932, %v1531, 0
        %v1952 = vsel %vm1932, %v1532, 0
        %v1955 = vsel %vm1932, %v1533, 0
        %v1958 = vsel %vm1932, %v1534, 0
        %v1961 = vsel %vm1932, %v1535, 0
        %v1964 = vsel %vm1932, %v1536, 0
        %v1967 = vsel %vm1932, %v1537, 0
        %v1970 = vsel %vm1932, %v1538, 0
        %v1973 = vsel %vm1932, %v1539, 0
        %v1976 = vsel %vm1932, %v1540, 0
        %v1979 = vsel %vm1932, %v1541, 0
        %v1982 = vsel %vm1932, %v1542, 0
        %v1985 = vsel %vm1932, %v1543, 0
        %v1988 = vsel %vm1932, %v1544, 0
        %v1991 = vsel %vm1932, %v1545, 0
        %v1994 = vsel %vm1932, %v1546, 0
        %v1997 = vsel %vm1932, %v1547, 0
        %v2000 = vsel %vm1932, %v1548, 0
        %v2003 = vsel %vm1932, %v1549, 0
        %v2006 = vsel %vm1932, %v1550, 0
        %v2009 = vsel %vm1932, %v1551, 0
        %v2012 = vsel %vm1932, %v1552, 0
        %v2015 = vsel %vm1932, %v1553, 0
        %v2018 = vsel %vm1932, %v1554, 0
        %v2021 = vsel %vm1932, %v1555, 0
        %v2024 = vsel %vm1932, %v1556, 0
        %v2027 = vsel %vm1932, %v1557, 0
        %vm2029 = vcmask 1042432
        %v2030 = vsel %vm2029, %v1928, 0
        %2032 = vmatprep.subr.mxu0 0.0
        %2033 = vmatpush1.msra.mxu0 %v1807
        %2034 = vmatprep.subr.mxu0 0.0
        %2035 = vmatpush1.msra.mxu0 %v1856
        %2036 = vmatprep.subr.mxu0 0.0
        %2037 = vmatpush1.msra.mxu0 %v1905
        %2038 = vmatprep.subr.mxu0 0.0
        %2039 = vmatpush1.msra.mxu0 %v2030
        %2040 = vmatprep.subr.mxu0 0.0
        %2041 = vmatpush1.msra.mxu0 0.0
        %2042 = vmatprep.subr.mxu0 0.0
        %2043 = vmatpush1.msra.mxu0 0.0
        %2044 = vmatprep.subr.mxu0 0.0
        %2045 = vmatpush1.msra.mxu0 0.0
        %2046 = vmatprep.subr.mxu0 0.0
        %2047 = vmatpush1.msra.mxu0 0.0
        %2048 = vmatprep.subr.mxu0 0.0
        %2049 = vmatpush1.msra.mxu0 0.0
        %2050 = vmatprep.subr.mxu0 0.0
        %2051 = vmatpush1.msra.mxu0 0.0
        %2052 = vmatprep.subr.mxu0 0.0
        %2053 = vmatpush1.msra.mxu0 0.0
        %2054 = vmatprep.subr.mxu0 0.0
        %2055 = vmatpush1.msra.mxu0 0.0
        %2056 = vmatprep.subr.mxu0 0.0
        %2057 = vmatpush1.msra.mxu0 0.0
        %2058 = vmatprep.subr.mxu0 0.0
        %2059 = vmatpush1.msra.mxu0 0.0
        %2060 = vmatprep.subr.mxu0 0.0
        %2061 = vmatpush1.msra.mxu0 0.0
        %2062 = vmatprep.subr.mxu0 0.0
        %2063 = vmatpush1.msra.mxu0 0.0
        %2064 = vmatprep.subr.mxu0 0.0
        %2065 = vmatpush1.msra.mxu0 0.0
        %2066 = vmatprep.subr.mxu0 0.0
        %2067 = vmatpush1.msra.mxu0 0.0
        %2068 = vmatprep.subr.mxu0 0.0
        %2069 = vmatpush1.msra.mxu0 0.0
        %2070 = vmatprep.subr.mxu0 0.0
        %2071 = vmatpush1.msra.mxu0 0.0
        %2072 = vmatprep.subr.mxu0 0.0
        %2073 = vmatpush1.msra.mxu0 0.0
        %2074 = vmatprep.subr.mxu0 0.0
        %2075 = vmatpush1.msra.mxu0 0.0
        %2076 = vmatprep.subr.mxu0 0.0
        %2077 = vmatpush1.msra.mxu0 0.0
        %2078 = vmatprep.subr.mxu0 0.0
        %2079 = vmatpush1.msra.mxu0 0.0
        %2080 = vmatprep.subr.mxu0 0.0
        %2081 = vmatpush1.msra.mxu0 0.0
        %2082 = vmatprep.subr.mxu0 0.0
        %2083 = vmatpush1.msra.mxu0 0.0
        %2084 = vmatprep.subr.mxu0 0.0
        %2085 = vmatpush1.msra.mxu0 0.0
        %2086 = vmatprep.subr.mxu0 0.0
        %2087 = vmatpush1.msra.mxu0 0.0
        %2088 = vmatprep.subr.mxu0 0.0
        %2089 = vmatpush1.msra.mxu0 0.0
        %2090 = vmatprep.subr.mxu0 0.0
        %2091 = vmatpush1.msra.mxu0 0.0
        %2092 = vmatprep.subr.mxu0 0.0
        %2093 = vmatpush1.msra.mxu0 0.0
        %2094 = vmatprep.subr.mxu0 0.0
        %2095 = vmatpush1.msra.mxu0 0.0
        %2096 = vmatprep.mubr.f32.mxu0 0.0
        %2097 = vmatmul.mubr.f32.gmra.mrb[0].mxu0 %v1934
        %v2098 = vpop.f32.mrb[0].mxu0
        %v2099 = vadd.f32 0.0, %v2098
        %v2100 = vpop.f32.mrb[0].mxu0
        %2101 = vmatprep.mubr.f32.mxu0 0.0
        %2102 = vmatmul.mubr.f32.gmra.mrb[0].mxu0 %v1937
        %v2103 = vpop.f32.mrb[0].mxu0
        %v2104 = vadd.f32 0.0, %v2103
        %v2105 = vpop.f32.mrb[0].mxu0
        %2106 = vmatprep.mubr.f32.mxu0 0.0
        %2107 = vmatmul.mubr.f32.gmra.mrb[0].mxu0 %v1940
        %v2108 = vpop.f32.mrb[0].mxu0
        %v2109 = vadd.f32 0.0, %v2108
        %v2110 = vpop.f32.mrb[0].mxu0
        %2111 = vmatprep.mubr.f32.mxu0 0.0
        %2112 = vmatmul.mubr.f32.gmra.mrb[0].mxu0 %v1943
        %v2113 = vpop.f32.mrb[0].mxu0
        %v2114 = vadd.f32 0.0, %v2113
        %v2115 = vpop.f32.mrb[0].mxu0
        %2116 = vmatprep.mubr.f32.mxu0 0.0
        %2117 = vmatmul.mubr.f32.gmra.mrb[0].mxu0 %v1946
        %v2118 = vpop.f32.mrb[0].mxu0
        %v2119 = vadd.f32 0.0, %v2118
        %v2120 = vpop.f32.mrb[0].mxu0
        %2121 = vmatprep.mubr.f32.mxu0 0.0
        %2122 = vmatmul.mubr.f32.gmra.mrb[0].mxu0 %v1949
        %v2123 = vpop.f32.mrb[0].mxu0
        %v2124 = vadd.f32 0.0, %v2123
        %v2125 = vpop.f32.mrb[0].mxu0
        %2126 = vmatprep.mubr.f32.mxu0 0.0
        %2127 = vmatmul.mubr.f32.gmra.mrb[0].mxu0 %v1952
        %v2128 = vpop.f32.mrb[0].mxu0
        %v2129 = vadd.f32 0.0, %v2128
        %v2130 = vpop.f32.mrb[0].mxu0
        %2131 = vmatprep.mubr.f32.mxu0 0.0
        %2132 = vmatmul.mubr.f32.gmra.mrb[0].mxu0 %v1955
        %v2133 = vpop.f32.mrb[0].mxu0
        %v2134 = vadd.f32 0.0, %v2133
        %v2135 = vpop.f32.mrb[0].mxu0
        %2136 = vmatprep.mubr.f32.mxu0 0.0
        %2137 = vmatmul.mubr.f32.gmra.mrb[0].mxu0 %v1958
        %v2138 = vpop.f32.mrb[0].mxu0
        %v2139 = vadd.f32 0.0, %v2138
        %v2140 = vpop.f32.mrb[0].mxu0
        %2141 = vmatprep.mubr.f32.mxu0 0.0
        %2142 = vmatmul.mubr.f32.gmra.mrb[0].mxu0 %v1961
        %v2143 = vpop.f32.mrb[0].mxu0
        %v2144 = vadd.f32 0.0, %v2143
        %v2145 = vpop.f32.mrb[0].mxu0
        %2146 = vmatprep.mubr.f32.mxu0 0.0
        %2147 = vmatmul.mubr.f32.gmra.mrb[0].mxu0 %v1964
        %v2148 = vpop.f32.mrb[0].mxu0
        %v2149 = vadd.f32 0.0, %v2148
        %v2150 = vpop.f32.mrb[0].mxu0
        %2151 = vmatprep.mubr.f32.mxu0 0.0
        %2152 = vmatmul.mubr.f32.gmra.mrb[0].mxu0 %v1967
        %v2153 = vpop.f32.mrb[0].mxu0
        %v2154 = vadd.f32 0.0, %v2153
        %v2155 = vpop.f32.mrb[0].mxu0
        %2156 = vmatprep.mubr.f32.mxu0 0.0
        %2157 = vmatmul.mubr.f32.gmra.mrb[0].mxu0 %v1970
        %v2158 = vpop.f32.mrb[0].mxu0
        %v2159 = vadd.f32 0.0, %v2158
        %v2160 = vpop.f32.mrb[0].mxu0
        %2161 = vmatprep.mubr.f32.mxu0 0.0
        %2162 = vmatmul.mubr.f32.gmra.mrb[0].mxu0 %v1973
        %v2163 = vpop.f32.mrb[0].mxu0
        %v2164 = vadd.f32 0.0, %v2163
        %v2165 = vpop.f32.mrb[0].mxu0
        %2166 = vmatprep.mubr.f32.mxu0 0.0
        %2167 = vmatmul.mubr.f32.gmra.mrb[0].mxu0 %v1976
        %v2168 = vpop.f32.mrb[0].mxu0
        %v2169 = vadd.f32 0.0, %v2168
        %v2170 = vpop.f32.mrb[0].mxu0
        %2171 = vmatprep.mubr.f32.mxu0 0.0
        %2172 = vmatmul.mubr.f32.gmra.mrb[0].mxu0 %v1979
        %v2173 = vpop.f32.mrb[0].mxu0
        %v2174 = vadd.f32 0.0, %v2173
        %v2175 = vpop.f32.mrb[0].mxu0
        %2176 = vmatprep.mubr.f32.mxu0 0.0
        %2177 = vmatmul.mubr.f32.gmra.mrb[0].mxu0 %v1982
        %v2178 = vpop.f32.mrb[0].mxu0
        %v2179 = vadd.f32 0.0, %v2178
        %v2180 = vpop.f32.mrb[0].mxu0
        %2181 = vmatprep.mubr.f32.mxu0 0.0
        %2182 = vmatmul.mubr.f32.gmra.mrb[0].mxu0 %v1985
        %v2183 = vpop.f32.mrb[0].mxu0
        %v2184 = vadd.f32 0.0, %v2183
        %v2185 = vpop.f32.mrb[0].mxu0
        %2186 = vmatprep.mubr.f32.mxu0 0.0
        %2187 = vmatmul.mubr.f32.gmra.mrb[0].mxu0 %v1988
        %v2188 = vpop.f32.mrb[0].mxu0
        %v2189 = vadd.f32 0.0, %v2188
        %v2190 = vpop.f32.mrb[0].mxu0
        %2191 = vmatprep.mubr.f32.mxu0 0.0
        %2192 = vmatmul.mubr.f32.gmra.mrb[0].mxu0 %v1991
        %v2193 = vpop.f32.mrb[0].mxu0
        %v2194 = vadd.f32 0.0, %v2193
        %v2195 = vpop.f32.mrb[0].mxu0
        %2196 = vmatprep.mubr.f32.mxu0 0.0
        %2197 = vmatmul.mubr.f32.gmra.mrb[0].mxu0 %v1994
        %v2198 = vpop.f32.mrb[0].mxu0
        %v2199 = vadd.f32 0.0, %v2198
        %v2200 = vpop.f32.mrb[0].mxu0
        %2201 = vmatprep.mubr.f32.mxu0 0.0
        %2202 = vmatmul.mubr.f32.gmra.mrb[0].mxu0 %v1997
        %v2203 = vpop.f32.mrb[0].mxu0
        %v2204 = vadd.f32 0.0, %v2203
        %v2205 = vpop.f32.mrb[0].mxu0
        %2206 = vmatprep.mubr.f32.mxu0 0.0
        %2207 = vmatmul.mubr.f32.gmra.mrb[0].mxu0 %v2000
        %v2208 = vpop.f32.mrb[0].mxu0
        %v2209 = vadd.f32 0.0, %v2208
        %v2210 = vpop.f32.mrb[0].mxu0
        %2211 = vmatprep.mubr.f32.mxu0 0.0
        %2212 = vmatmul.mubr.f32.gmra.mrb[0].mxu0 %v2003
        %v2213 = vpop.f32.mrb[0].mxu0
        %v2214 = vadd.f32 0.0, %v2213
        %v2215 = vpop.f32.mrb[0].mxu0
        %2216 = vmatprep.mubr.f32.mxu0 0.0
        %2217 = vmatmul.mubr.f32.gmra.mrb[0].mxu0 %v2006
        %v2218 = vpop.f32.mrb[0].mxu0
        %v2219 = vadd.f32 0.0, %v2218
        %v2220 = vpop.f32.mrb[0].mxu0
        %2221 = vmatprep.mubr.f32.mxu0 0.0
        %2222 = vmatmul.mubr.f32.gmra.mrb[0].mxu0 %v2009
        %v2223 = vpop.f32.mrb[0].mxu0
        %v2224 = vadd.f32 0.0, %v2223
        %v2225 = vpop.f32.mrb[0].mxu0
        %2226 = vmatprep.mubr.f32.mxu0 0.0
        %2227 = vmatmul.mubr.f32.gmra.mrb[0].mxu0 %v2012
        %v2228 = vpop.f32.mrb[0].mxu0
        %v2229 = vadd.f32 0.0, %v2228
        %v2230 = vpop.f32.mrb[0].mxu0
        %2231 = vmatprep.mubr.f32.mxu0 0.0
        %2232 = vmatmul.mubr.f32.gmra.mrb[0].mxu0 %v2015
        %v2233 = vpop.f32.mrb[0].mxu0
        %v2234 = vadd.f32 0.0, %v2233
        %v2235 = vpop.f32.mrb[0].mxu0
        %2236 = vmatprep.mubr.f32.mxu0 0.0
        %2237 = vmatmul.mubr.f32.gmra.mrb[0].mxu0 %v2018
        %v2238 = vpop.f32.mrb[0].mxu0
        %v2239 = vadd.f32 0.0, %v2238
        %v2240 = vpop.f32.mrb[0].mxu0
        %2241 = vmatprep.mubr.f32.mxu0 0.0
        %2242 = vmatmul.mubr.f32.gmra.mrb[0].mxu0 %v2021
        %v2243 = vpop.f32.mrb[0].mxu0
        %v2244 = vadd.f32 0.0, %v2243
        %v2245 = vpop.f32.mrb[0].mxu0
        %2246 = vmatprep.mubr.f32.mxu0 0.0
        %2247 = vmatmul.mubr.f32.gmra.mrb[0].mxu0 %v2024
        %v2248 = vpop.f32.mrb[0].mxu0
        %v2249 = vadd.f32 0.0, %v2248
        %v2250 = vpop.f32.mrb[0].mxu0
        %2251 = vmatprep.mubr.f32.mxu0 0.0
        %2252 = vmatmul.mubr.f32.gmra.mrb[0].mxu0 %v2027
        %v2253 = vpop.f32.mrb[0].mxu0
        %v2254 = vadd.f32 0.0, %v2253
        %v2255 = vpop.f32.mrb[0].mxu0
        %2256 = vdwg.mxu0
        %vm2257 = vcmask 523264
        %v2258 = vsel %vm2257, %v2099, 0.0
        %v2259 = vsel %vm2257, %v2104, 0.0
        %v2260 = vadd.f32 %v2258, %v2259
        %v2261 = vsel %vm2257, %v2109, 0.0
        %v2262 = vadd.f32 %v2260, %v2261
        %v2263 = vsel %vm2257, %v2114, 0.0
        %v2264 = vadd.f32 %v2262, %v2263
        %v2265 = vsel %vm2257, %v2119, 0.0
        %v2266 = vadd.f32 %v2264, %v2265
        %v2267 = vsel %vm2257, %v2124, 0.0
        %v2268 = vadd.f32 %v2266, %v2267
        %v2269 = vsel %vm2257, %v2129, 0.0
        %v2270 = vadd.f32 %v2268, %v2269
        %v2271 = vsel %vm2257, %v2134, 0.0
        %v2272 = vadd.f32 %v2270, %v2271
        %v2273 = vsel %vm2257, %v2139, 0.0
        %v2274 = vadd.f32 %v2272, %v2273
        %v2275 = vsel %vm2257, %v2144, 0.0
        %v2276 = vadd.f32 %v2274, %v2275
        %v2277 = vsel %vm2257, %v2149, 0.0
        %v2278 = vadd.f32 %v2276, %v2277
        %v2279 = vsel %vm2257, %v2154, 0.0
        %v2280 = vadd.f32 %v2278, %v2279
        %v2281 = vsel %vm2257, %v2159, 0.0
        %v2282 = vadd.f32 %v2280, %v2281
        %v2283 = vsel %vm2257, %v2164, 0.0
        %v2284 = vadd.f32 %v2282, %v2283
        %v2285 = vsel %vm2257, %v2169, 0.0
        %v2286 = vadd.f32 %v2284, %v2285
        %v2287 = vsel %vm2257, %v2174, 0.0
        %v2288 = vadd.f32 %v2286, %v2287
        %v2289 = vsel %vm2257, %v2179, 0.0
        %v2290 = vadd.f32 %v2288, %v2289
        %v2291 = vsel %vm2257, %v2184, 0.0
        %v2292 = vadd.f32 %v2290, %v2291
        %v2293 = vsel %vm2257, %v2189, 0.0
        %v2294 = vadd.f32 %v2292, %v2293
        %v2295 = vsel %vm2257, %v2194, 0.0
        %v2296 = vadd.f32 %v2294, %v2295
        %v2297 = vsel %vm2257, %v2199, 0.0
        %v2298 = vadd.f32 %v2296, %v2297
        %v2299 = vsel %vm2257, %v2204, 0.0
        %v2300 = vadd.f32 %v2298, %v2299
        %v2301 = vsel %vm2257, %v2209, 0.0
        %v2302 = vadd.f32 %v2300, %v2301
        %v2303 = vsel %vm2257, %v2214, 0.0
        %v2304 = vadd.f32 %v2302, %v2303
        %v2305 = vsel %vm2257, %v2219, 0.0
        %v2306 = vadd.f32 %v2304, %v2305
        %v2307 = vsel %vm2257, %v2224, 0.0
        %v2308 = vadd.f32 %v2306, %v2307
        %v2309 = vsel %vm2257, %v2229, 0.0
        %v2310 = vadd.f32 %v2308, %v2309
        %v2311 = vsel %vm2257, %v2234, 0.0
        %v2312 = vadd.f32 %v2310, %v2311
        %v2313 = vsel %vm2257, %v2239, 0.0
        %v2314 = vadd.f32 %v2312, %v2313
        %v2315 = vsel %vm2257, %v2244, 0.0
        %v2316 = vadd.f32 %v2314, %v2315
        %v2317 = vsel %vm2257, %v2249, 0.0
        %v2318 = vadd.f32 %v2316, %v2317
        %v2319 = vsel %vm2257, %v2254, 0.0
        %v2320 = vadd.f32 %v2318, %v2319
        %v2321 = vrot.slane %v2320, 4
        %v2322 = vadd.f32 %v2320, %v2321
        %v2323 = vrot.slane %v2322, 2
        %v2324 = vadd.f32 %v2322, %v2323
        %v2325 = vrot.slane %v2324, 1
        %v2326 = vadd.f32 %v2324, %v2325
        %v2327 = vmul.f32 %v2099, %v2099
        %v2328 = vmul.f32 %v2104, %v2104
        %v2329 = vmul.f32 %v2109, %v2109
        %v2330 = vmul.f32 %v2114, %v2114
        %v2331 = vmul.f32 %v2119, %v2119
        %v2332 = vmul.f32 %v2124, %v2124
        %v2333 = vmul.f32 %v2129, %v2129
        %v2334 = vmul.f32 %v2134, %v2134
        %v2335 = vmul.f32 %v2139, %v2139
        %v2336 = vmul.f32 %v2144, %v2144
        %v2337 = vmul.f32 %v2149, %v2149
        %v2338 = vmul.f32 %v2154, %v2154
        %v2339 = vmul.f32 %v2159, %v2159
        %v2340 = vmul.f32 %v2164, %v2164
        %v2341 = vmul.f32 %v2169, %v2169
        %v2342 = vmul.f32 %v2174, %v2174
        %v2343 = vmul.f32 %v2179, %v2179
        %v2344 = vmul.f32 %v2184, %v2184
        %v2345 = vmul.f32 %v2189, %v2189
        %v2346 = vmul.f32 %v2194, %v2194
        %v2347 = vmul.f32 %v2199, %v2199
        %v2348 = vmul.f32 %v2204, %v2204
        %v2349 = vmul.f32 %v2209, %v2209
        %v2350 = vmul.f32 %v2214, %v2214
        %v2351 = vmul.f32 %v2219, %v2219
        %v2352 = vmul.f32 %v2224, %v2224
        %v2353 = vmul.f32 %v2229, %v2229
        %v2354 = vmul.f32 %v2234, %v2234
        %v2355 = vmul.f32 %v2239, %v2239
        %v2356 = vmul.f32 %v2244, %v2244
        %v2357 = vmul.f32 %v2249, %v2249
        %v2358 = vmul.f32 %v2254, %v2254
        %v2359 = vsel %vm2257, %v2327, 0.0
        %v2360 = vsel %vm2257, %v2328, 0.0
        %v2361 = vadd.f32 %v2359, %v2360
        %v2362 = vsel %vm2257, %v2329, 0.0
        %v2363 = vadd.f32 %v2361, %v2362
        %v2364 = vsel %vm2257, %v2330, 0.0
        %v2365 = vadd.f32 %v2363, %v2364
        %v2366 = vsel %vm2257, %v2331, 0.0
        %v2367 = vadd.f32 %v2365, %v2366
        %v2368 = vsel %vm2257, %v2332, 0.0
        %v2369 = vadd.f32 %v2367, %v2368
        %v2370 = vsel %vm2257, %v2333, 0.0
        %v2371 = vadd.f32 %v2369, %v2370
        %v2372 = vsel %vm2257, %v2334, 0.0
        %v2373 = vadd.f32 %v2371, %v2372
        %v2374 = vsel %vm2257, %v2335, 0.0
        %v2375 = vadd.f32 %v2373, %v2374
        %v2376 = vsel %vm2257, %v2336, 0.0
        %v2377 = vadd.f32 %v2375, %v2376
        %v2378 = vsel %vm2257, %v2337, 0.0
        %v2379 = vadd.f32 %v2377, %v2378
        %v2380 = vsel %vm2257, %v2338, 0.0
        %v2381 = vadd.f32 %v2379, %v2380
        %v2382 = vsel %vm2257, %v2339, 0.0
        %v2383 = vadd.f32 %v2381, %v2382
        %v2384 = vsel %vm2257, %v2340, 0.0
        %v2385 = vadd.f32 %v2383, %v2384
        %v2386 = vsel %vm2257, %v2341, 0.0
        %v2387 = vadd.f32 %v2385, %v2386
        %v2388 = vsel %vm2257, %v2342, 0.0
        %v2389 = vadd.f32 %v2387, %v2388
        %v2390 = vsel %vm2257, %v2343, 0.0
        %v2391 = vadd.f32 %v2389, %v2390
        %v2392 = vsel %vm2257, %v2344, 0.0
        %v2393 = vadd.f32 %v2391, %v2392
        %v2394 = vsel %vm2257, %v2345, 0.0
        %v2395 = vadd.f32 %v2393, %v2394
        %v2396 = vsel %vm2257, %v2346, 0.0
        %v2397 = vadd.f32 %v2395, %v2396
        %v2398 = vsel %vm2257, %v2347, 0.0
        %v2399 = vadd.f32 %v2397, %v2398
        %v2400 = vsel %vm2257, %v2348, 0.0
        %v2401 = vadd.f32 %v2399, %v2400
        %v2402 = vsel %vm2257, %v2349, 0.0
        %v2403 = vadd.f32 %v2401, %v2402
        %v2404 = vsel %vm2257, %v2350, 0.0
        %v2405 = vadd.f32 %v2403, %v2404
        %v2406 = vsel %vm2257, %v2351, 0.0
        %v2407 = vadd.f32 %v2405, %v2406
        %v2408 = vsel %vm2257, %v2352, 0.0
        %v2409 = vadd.f32 %v2407, %v2408
        %v2410 = vsel %vm2257, %v2353, 0.0
        %v2411 = vadd.f32 %v2409, %v2410
        %v2412 = vsel %vm2257, %v2354, 0.0
        %v2413 = vadd.f32 %v2411, %v2412
        %v2414 = vsel %vm2257, %v2355, 0.0
        %v2415 = vadd.f32 %v2413, %v2414
        %v2416 = vsel %vm2257, %v2356, 0.0
        %v2417 = vadd.f32 %v2415, %v2416
        %v2418 = vsel %vm2257, %v2357, 0.0
        %v2419 = vadd.f32 %v2417, %v2418
        %v2420 = vsel %vm2257, %v2358, 0.0
        %v2421 = vadd.f32 %v2419, %v2420
        %v2422 = vrot.slane %v2421, 4
        %v2423 = vadd.f32 %v2421, %v2422
        %v2424 = vrot.slane %v2423, 2
        %v2425 = vadd.f32 %v2423, %v2424
        %v2426 = vrot.slane %v2425, 1
        %v2427 = vadd.f32 %v2425, %v2426
        %vm2428 = vcmask 1040384
        %v2429 = vsel %vm2428, %v2326, %v2427
        %vm2430 = vcmask 517120
        %2431 = vst.msk [vmem:[%s225] sm:$0x3] %vm2430, %v2429
        %v2464 = vrot.slane %v2099, 7
        %v2465 = vrot.slane %v2104, 7
        %v2466 = vsel %vm2428, %v2464, %v2465
        %v2467 = vrot.slane %v2109, 7
        %v2468 = vrot.slane %v2114, 7
        %v2469 = vsel %vm2428, %v2467, %v2468
        %v2470 = vrot.slane %v2119, 7
        %v2471 = vrot.slane %v2124, 7
        %v2472 = vsel %vm2428, %v2470, %v2471
        %v2473 = vrot.slane %v2129, 7
        %v2474 = vrot.slane %v2134, 7
        %v2475 = vsel %vm2428, %v2473, %v2474
        %v2476 = vrot.slane %v2139, 7
        %v2477 = vrot.slane %v2144, 7
        %v2478 = vsel %vm2428, %v2476, %v2477
        %v2479 = vrot.slane %v2149, 7
        %v2480 = vrot.slane %v2154, 7
        %v2481 = vsel %vm2428, %v2479, %v2480
        %v2482 = vrot.slane %v2159, 7
        %v2483 = vrot.slane %v2164, 7
        %v2484 = vsel %vm2428, %v2482, %v2483
        %v2485 = vrot.slane %v2169, 7
        %v2486 = vrot.slane %v2174, 7
        %v2487 = vsel %vm2428, %v2485, %v2486
        %v2488 = vrot.slane %v2179, 7
        %v2489 = vrot.slane %v2184, 7
        %v2490 = vsel %vm2428, %v2488, %v2489
        %v2491 = vrot.slane %v2189, 7
        %v2492 = vrot.slane %v2194, 7
        %v2493 = vsel %vm2428, %v2491, %v2492
        %v2494 = vrot.slane %v2199, 7
        %v2495 = vrot.slane %v2204, 7
        %v2496 = vsel %vm2428, %v2494, %v2495
        %v2497 = vrot.slane %v2209, 7
        %v2498 = vrot.slane %v2214, 7
        %v2499 = vsel %vm2428, %v2497, %v2498
        %v2500 = vrot.slane %v2219, 7
        %v2501 = vrot.slane %v2224, 7
        %v2502 = vsel %vm2428, %v2500, %v2501
        %v2503 = vrot.slane %v2229, 7
        %v2504 = vrot.slane %v2234, 7
        %v2505 = vsel %vm2428, %v2503, %v2504
        %v2506 = vrot.slane %v2239, 7
        %v2507 = vrot.slane %v2244, 7
        %v2508 = vsel %vm2428, %v2506, %v2507
        %v2509 = vrot.slane %v2249, 7
        %v2510 = vrot.slane %v2254, 7
        %v2511 = vsel %vm2428, %v2509, %v2510
        %v2560 = vsel %vm2428, 0.0, %v2464
        %v2561 = vsel %vm2428, 0.0, %v2467
        %v2562 = vsel %vm2428, 0.0, %v2470
        %v2563 = vsel %vm2428, 0.0, %v2473
        %v2564 = vsel %vm2428, 0.0, %v2476
        %v2565 = vsel %vm2428, 0.0, %v2479
        %v2566 = vsel %vm2428, 0.0, %v2482
        %v2567 = vsel %vm2428, 0.0, %v2485
        %v2568 = vsel %vm2428, 0.0, %v2488
        %v2569 = vsel %vm2428, 0.0, %v2491
        %v2570 = vsel %vm2428, 0.0, %v2494
        %v2571 = vsel %vm2428, 0.0, %v2497
        %v2572 = vsel %vm2428, 0.0, %v2500
        %v2573 = vsel %vm2428, 0.0, %v2503
        %v2574 = vsel %vm2428, 0.0, %v2506
        %v2575 = vsel %vm2428, 0.0, %v2509
        %v2576 = vsel %vm2428, %v2465, 0.0
        %v2577 = vsel %vm2428, %v2468, 0.0
        %v2578 = vsel %vm2428, %v2471, 0.0
        %v2579 = vsel %vm2428, %v2474, 0.0
        %v2580 = vsel %vm2428, %v2477, 0.0
        %v2581 = vsel %vm2428, %v2480, 0.0
        %v2582 = vsel %vm2428, %v2483, 0.0
        %v2583 = vsel %vm2428, %v2486, 0.0
        %v2584 = vsel %vm2428, %v2489, 0.0
        %v2585 = vsel %vm2428, %v2492, 0.0
        %v2586 = vsel %vm2428, %v2495, 0.0
        %v2587 = vsel %vm2428, %v2498, 0.0
        %v2588 = vsel %vm2428, %v2501, 0.0
        %v2589 = vsel %vm2428, %v2504, 0.0
        %v2590 = vsel %vm2428, %v2507, 0.0
        %v2591 = vsel %vm2428, %v2510, 0.0
        %2592 = vst.msk [vmem:[%s235] sm:$0xff] %vm2257, 0.0
        %2593 = vst.msk [vmem:[%s235 + $0x8] sm:$0xff] %vm2257, 0.0
        %2594 = vst.msk [vmem:[%s235 + $0x10] sm:$0x3] %vm2430, 0.0
        %2595 = vst.msk [vmem:[%s235 + $0x18] sm:$0xff] %vm2257, %v2560
        %2596 = vst.msk [vmem:[%s235 + $0x20] sm:$0xff] %vm2257, %v2466
        %2597 = vst.msk [vmem:[%s235 + $0x28] sm:$0x3] %vm2430, %v2576
        %2598 = vst.msk [vmem:[%s235 + $0x30] sm:$0xff] %vm2257, %v2561
        %2599 = vst.msk [vmem:[%s235 + $0x38] sm:$0xff] %vm2257, %v2469
        %2600 = vst.msk [vmem:[%s235 + $0x40] sm:$0x3] %vm2430, %v2577
        %2601 = vst.msk [vmem:[%s235 + $0x48] sm:$0xff] %vm2257, %v2562
        %2602 = vst.msk [vmem:[%s235 + $0x50] sm:$0xff] %vm2257, %v2472
        %2603 = vst.msk [vmem:[%s235 + $0x58] sm:$0x3] %vm2430, %v2578
        %2604 = vst.msk [vmem:[%s235 + $0x60] sm:$0xff] %vm2257, %v2563
        %2605 = vst.msk [vmem:[%s235 + $0x68] sm:$0xff] %vm2257, %v2475
        %2606 = vst.msk [vmem:[%s235 + $0x70] sm:$0x3] %vm2430, %v2579
        %2607 = vst.msk [vmem:[%s235 + $0x78] sm:$0xff] %vm2257, %v2564
        %2608 = vst.msk [vmem:[%s235 + $0x80] sm:$0xff] %vm2257, %v2478
        %2609 = vst.msk [vmem:[%s235 + $0x88] sm:$0x3] %vm2430, %v2580
        %2610 = vst.msk [vmem:[%s235 + $0x90] sm:$0xff] %vm2257, %v2565
        %2611 = vst.msk [vmem:[%s235 + $0x98] sm:$0xff] %vm2257, %v2481
        %2612 = vst.msk [vmem:[%s235 + $0xa0] sm:$0x3] %vm2430, %v2581
        %2613 = vst.msk [vmem:[%s235 + $0xa8] sm:$0xff] %vm2257, %v2566
        %2614 = vst.msk [vmem:[%s235 + $0xb0] sm:$0xff] %vm2257, %v2484
        %2615 = vst.msk [vmem:[%s235 + $0xb8] sm:$0x3] %vm2430, %v2582
        %2616 = vst.msk [vmem:[%s235 + $0xc0] sm:$0xff] %vm2257, %v2567
        %2617 = vst.msk [vmem:[%s235 + $0xc8] sm:$0xff] %vm2257, %v2487
        %2618 = vst.msk [vmem:[%s235 + $0xd0] sm:$0x3] %vm2430, %v2583
        %2619 = vst.msk [vmem:[%s235 + $0xd8] sm:$0xff] %vm2257, %v2568
        %2620 = vst.msk [vmem:[%s235 + $0xe0] sm:$0xff] %vm2257, %v2490
        %2621 = vst.msk [vmem:[%s235 + $0xe8] sm:$0x3] %vm2430, %v2584
        %2622 = vst.msk [vmem:[%s235 + $0xf0] sm:$0xff] %vm2257, %v2569
        %2623 = vst.msk [vmem:[%s235 + $0xf8] sm:$0xff] %vm2257, %v2493
        %2624 = vst.msk [vmem:[%s235 + $0x100] sm:$0x3] %vm2430, %v2585
        %2625 = vst.msk [vmem:[%s235 + $0x108] sm:$0xff] %vm2257, %v2570
        %2626 = vst.msk [vmem:[%s235 + $0x110] sm:$0xff] %vm2257, %v2496
        %2627 = vst.msk [vmem:[%s235 + $0x118] sm:$0x3] %vm2430, %v2586
        %2628 = vst.msk [vmem:[%s235 + $0x120] sm:$0xff] %vm2257, %v2571
        %2629 = vst.msk [vmem:[%s235 + $0x128] sm:$0xff] %vm2257, %v2499
        %2630 = vst.msk [vmem:[%s235 + $0x130] sm:$0x3] %vm2430, %v2587
        %2631 = vst.msk [vmem:[%s235 + $0x138] sm:$0xff] %vm2257, %v2572
        %2632 = vst.msk [vmem:[%s235 + $0x140] sm:$0xff] %vm2257, %v2502
        %2633 = vst.msk [vmem:[%s235 + $0x148] sm:$0x3] %vm2430, %v2588
        %2634 = vst.msk [vmem:[%s235 + $0x150] sm:$0xff] %vm2257, %v2573
        %2635 = vst.msk [vmem:[%s235 + $0x158] sm:$0xff] %vm2257, %v2505
        %2636 = vst.msk [vmem:[%s235 + $0x160] sm:$0x3] %vm2430, %v2589
        %2637 = vst.msk [vmem:[%s235 + $0x168] sm:$0xff] %vm2257, %v2574
        %2638 = vst.msk [vmem:[%s235 + $0x170] sm:$0xff] %vm2257, %v2508
        %2639 = vst.msk [vmem:[%s235 + $0x178] sm:$0x3] %vm2430, %v2590
        %2640 = vst.msk [vmem:[%s235 + $0x180] sm:$0xff] %vm2257, %v2575
        %2641 = vst.msk [vmem:[%s235 + $0x188] sm:$0xff] %vm2257, %v2511
        %2642 = vst.msk [vmem:[%s235 + $0x190] sm:$0x3] %vm2430, %v2591
        %2643 = vst.msk [vmem:[%s235 + $0x198] sm:$0xff] %vm2257, 0.0
        %2644 = vst.msk [vmem:[%s235 + $0x1a0] sm:$0xff] %vm2257, 0.0
        %2645 = vst.msk [vmem:[%s235 + $0x1a8] sm:$0x3] %vm2430, 0.0
        %p2646 = scmp.lt.s32.totalorder %s20, 1
        %s2647 = scalar_select %p2646, %s20, 1
        %s2648 = smul.addr %s2647, 54
        %s2649 = smul.addr %s2648, 8
        %s2650 = scalar_lea.vmem %s4, %s2649
        %s2651 = sand.u32 %s143, 1
        %s2652 = scalar_lea.sflag [#allocation3], %s2651
        %s2653 = sand.u32 %s143, 1
        %s2654 = smul.addr %s2653, 2
        %s2655 = scalar_lea.vmem [#allocation2], %s2654
        // Predicated region
        $region37: #{tpu_custom_call.1} parent=35 // pred_check
          %p2656 = pneg %p127
        $region38: #{tpu_custom_call.1} parent=35 // pred_check_branch
          %2658 = sbr.rel (%p2656) target = $region40
        $region39: #{tpu_custom_call.1} parent=35 // pred_region
          _
        $region40: #{tpu_custom_call.1} parent=35 // pred_fallthru
          _
        // Predicated region
        $region41: #{tpu_custom_call.1} parent=35 // pred_check
          %p2659 = pneg %p153
        $region42: #{tpu_custom_call.1} parent=35 // pred_check_branch
          %2661 = sbr.rel (%p2659) target = $region44
        $region43: #{tpu_custom_call.1} parent=35 // pred_region
          %s2663 = ssub.s32 32, 32
          %2664 = vsyncadd %s2652, %s2663
          %s2665 = smul.addr %s20, 32
          %s2666 = scalar_lea.hbm %s5, %s2665
          %s2668 = sshll.u32 %s2655, 4
          %s2669 = int_to_ptr.vmem [resolvable:$true] %s2668
          %2671 = dma.vmem_to_hbm [thread:$0]  %s2669, 32, %s2666, %s2652
        $region44: #{tpu_custom_call.1} parent=35 // pred_fallthru
          _
      $region36: #{tpu_custom_call.1} parent=5 // pred_fallthru
        _
      %p2672 = scmp.le.s32.totalorder 2, %s15
      // Predicated region
      $region45: #{tpu_custom_call.1} parent=5 // pred_check
        %p2673 = pneg %p2672
      $region46: #{tpu_custom_call.1} parent=5 // pred_check_branch
        %2675 = sbr.rel (%p2673) target = $region48
      $region47: #{tpu_custom_call.1} parent=5 // pred_region
        %s2676 = ssub.s32 %s15, 2
        // Predicated region
        $region49: #{tpu_custom_call.1} parent=47 // pred_check
          %p2677 = pneg %p133
        $region50: #{tpu_custom_call.1} parent=47 // pred_check_branch
          %2679 = sbr.rel (%p2677) target = $region52
        $region51: #{tpu_custom_call.1} parent=47 // pred_region
          %p2680 = scmp.lt.s32.totalorder %s21, 1
          %s2681 = scalar_select %p2680, %s21, 1
          %s2682 = smul.addr %s2681, 54
          %s2683 = smul.addr %s2682, 8
          %s2684 = scalar_lea.vmem %s4, %s2683
        $region52: #{tpu_custom_call.1} parent=47 // pred_fallthru
          _
        // Predicated region
        $region53: #{tpu_custom_call.1} parent=47 // pred_check
          %p2685 = pneg %p159
        $region54: #{tpu_custom_call.1} parent=47 // pred_check_branch
          %2687 = sbr.rel (%p2685) target = $region56
        $region55: #{tpu_custom_call.1} parent=47 // pred_region
          %s2688 = sand.u32 %s144, 1
          %s2689 = scalar_lea.sflag [#allocation3], %s2688
          %s2690 = sand.u32 %s144, 1
          %s2691 = smul.addr %s2690, 2
          %s2692 = scalar_lea.vmem [#allocation2], %s2691
          %2693 = dma.done %s2689, 32
        $region56: #{tpu_custom_call.1} parent=47 // pred_fallthru
          _
      $region48: #{tpu_custom_call.1} parent=5 // pred_fallthru
        _
    $region6: #{tpu_custom_call.1} parent=1 // loop_footer
      %s19 = sadd.s32 1, %s15
    $region7: #{tpu_custom_call.1} parent=1 // loop_footer_branch
      %14 = sbr.rel target = $region3
    $region8: #{tpu_custom_call.1} parent=1 // loop_exit
      _
    %2694 = vsyncpa [#allocation3], 1
    %s2695 = scalar_lea.sflag [#allocation3], 1
    %2696 = vsyncpa %s2695, 1

</llo_original>
